<compile_context>
chip_gen: v7x
topology: tpu7x:2x2x1
jax: 0.10.0
libtpu: 0.0.40
codegen_flags: <defaults>
</compile_context>

<pallas_src>
import jax
import jax.numpy as jnp
import numpy as np
from jax.experimental import pallas as pl
from jax.experimental.pallas import tpu as pltpu

KSIZE = 5
PAD = KSIZE // 2
EPS = 1e-5
_INV_SQRT2 = 0.7071067811865476
_STAGE_TAIL = 8        # extra staged rows beyond Nr (>= KSIZE-1 so every tap slice fits)


def _round_up(a, b):
    return -(-a // b) * b


def lpi_kernel(x_ref, w1_ref, b1_ref, gamma_ref, beta_ref, w2_ref, b2_ref,
               out_ref, stage_ref):
    """One grid step = `bblk` folded batches.

    x_ref / out_ref : (bblk, N, C)
    w*_ref          : (KSIZE, C_in, C_out)  per-tap conv weights
    b*/gamma/beta   : (1, 1, C) f32
    stage_ref       : VMEM scratch (bblk, Nr + _STAGE_TAIL, C); per-batch layout:
                        rows [0, PAD)      zeros (left halo)
                        rows [PAD, PAD+N)  data
                        rows [PAD+N, Ns)   zeros (right halo + row padding)
    """
    bblk, N, C = out_ref.shape
    Ns = stage_ref.shape[1]
    Nr = Ns - _STAGE_TAIL                 # row-padded length, multiple of the sublane size
    stage_dt = stage_ref.dtype

    # ---- halo zeroing: two dense row-band stores, once per grid step (megacore-safe) ----
    stage_ref[:, 0:PAD, :] = jnp.zeros((bblk, PAD, C), stage_dt)
    stage_ref[:, PAD + N:, :] = jnp.zeros((bblk, Ns - PAD - N, C), stage_dt)

    def conv(w_ref, b_ref):
        # KSIZE accumulated MXU matmuls over sublane-shifted, lane-aligned READS of the
        # staging buffer.  The reshape is a free view because Nr % sublane == 0.
        acc = None
        for k in range(KSIZE):
            lhs = stage_ref[:, k:k + Nr, :]                      # (bblk, Nr, C)
            lhs2 = lhs.reshape(bblk * Nr, C)
            d = jnp.dot(lhs2, w_ref[k], preferred_element_type=jnp.float32)
            acc = d if acc is None else acc + d
        return acc.reshape(bblk, Nr, C) + b_ref[...]             # (bblk, Nr, C) f32

    # ---- conv1: single lane-aligned staging store, then 5 shifted matmuls ----
    stage_ref[:, PAD:PAD + N, :] = x_ref[...].astype(stage_dt)
    y = conv(w1_ref, b1_ref)

    # ---- exact (erf) GELU: matches PyTorch nn.GELU default (tanh variant would use the
    #      EUP slot but breaks bit-parity; kept exact per tolerance requirement) ----
    y = 0.5 * y * (1.0 + jax.lax.erf(y * jnp.float32(_INV_SQRT2)))

    # ---- GroupNorm(num_groups == num_channels): per-(batch, channel) stats over N ----
    if Nr == N:
        mean = jnp.mean(y, axis=1, keepdims=True)
        yc = y - mean
        var = jnp.mean(yc * yc, axis=1, keepdims=True)
        y = yc * jax.lax.rsqrt(var + EPS) * gamma_ref[...] + beta_ref[...]
    else:
        # Row-padded path (N not a multiple of the sublane size): mask rows >= N so they
        # contribute neither to the stats nor (as non-zeros) to conv2's halo.
        row = jax.lax.broadcasted_iota(jnp.int32, (1, Nr, 1), 1)
        valid = row < N
        inv_n = jnp.float32(1.0 / N)
        y = jnp.where(valid, y, 0.0)
        mean = jnp.sum(y, axis=1, keepdims=True) * inv_n
        yc = y - mean
        var = jnp.sum(jnp.where(valid, yc * yc, 0.0), axis=1, keepdims=True) * inv_n
        y = yc * jax.lax.rsqrt(var + EPS) * gamma_ref[...] + beta_ref[...]
        y = jnp.where(valid, y, 0.0)

    # ---- conv2: restage normalized activations (rows >= N are zero), then matmuls ----
    stage_ref[:, PAD:PAD + Nr, :] = y.astype(stage_dt)
    y = conv(w2_ref, b2_ref)
    if Nr != N:
        y = y[:, :N, :]

    # ---- residual: re-read x_ref here instead of holding it live across the body ----
    out_ref[...] = (y + x_ref[...].astype(jnp.float32)).astype(out_ref.dtype)


def _tc_count():
    """Best-effort TensorCores-per-chip (v7x has 2; v5e/v6e have 1)."""
    try:
        d = jax.devices()[0]
        for attr in ("num_cores", "core_count"):
            v = getattr(d, attr, None)
            if isinstance(v, int) and v > 0:
                return v
        if "v7" in str(getattr(d, "device_kind", "")).lower():
            return 2
    except Exception:
        pass
    return 1


def lpi_pallas(x, w1, b1, gamma, beta, w2, b2, *, bblk=None,
               matmul_dtype=jnp.float32, vmem_budget_bytes=20 * 1024 * 1024):
    """x: (B, N, C); w1/w2 in torch Conv1d layout (C_out, C_in, K)."""
    B, N, C = x.shape
    sublane = 8 if jnp.dtype(matmul_dtype).itemsize == 4 else 16
    Nr = _round_up(N, sublane)            # row-padded length -> free 3D<->2D reshapes
    Ns = Nr + _STAGE_TAIL
    n_cores = _tc_count()

    # ---- block sizing: biggest block under a per-step VMEM budget (double-buffered
    #      in/out blocks + staging buffer + matmul/GN intermediates); no B//2 halving on
    #      single-TC chips; grid-step count kept a multiple of the TC count on v7x. ----
    lane_bytes = 4 * _round_up(C, 128)                 # fp32 intermediates, lane-padded
    per_row = 7 * lane_bytes                           # ~ 2*in + 2*out + stage + temps
    max_rows = max(Nr, vmem_budget_bytes // per_row)
    if bblk is None:
        bblk = max(1, min(B, max_rows // Nr))
        if n_cores > 1:
            bblk = max(1, min(bblk, _round_up(B, n_cores) // n_cores))
    bblk = max(1, min(bblk, B))

    # Pad B (instead of shrinking bblk to 1 for awkward/prime B) and keep an even step
    # count on multi-TC chips. Padded batches are all-zero (no NaNs) and sliced off.
    steps = -(-B // bblk)
    if n_cores > 1 and steps > 1:
        steps = _round_up(steps, n_cores)
    Bp = steps * bblk
    x_in = x if Bp == B else jnp.pad(x, ((0, Bp - B), (0, 0), (0, 0)))

    # Per-tap weights: w_k[c_in, c_out] = w_torch[c_out, c_in, k].
    w1k = jnp.transpose(w1, (2, 1, 0)).astype(matmul_dtype)    # (K, C_in, C_out)
    w2k = jnp.transpose(w2, (2, 1, 0)).astype(matmul_dtype)
    b1r = b1.reshape(1, 1, C).astype(jnp.float32)
    b2r = b2.reshape(1, 1, C).astype(jnp.float32)
    gr = gamma.reshape(1, 1, C).astype(jnp.float32)
    br = beta.reshape(1, 1, C).astype(jnp.float32)

    out = pl.pallas_call(
        lpi_kernel,
        out_shape=jax.ShapeDtypeStruct((Bp, N, C), x.dtype),
        grid_spec=pltpu.PrefetchScalarGridSpec(
            num_scalar_prefetch=0,
            grid=(steps,),
            in_specs=[
                pl.BlockSpec((bblk, N, C), lambda i: (i, 0, 0)),     # x (read twice in-kernel)
                pl.BlockSpec((KSIZE, C, C), lambda i: (0, 0, 0)),    # w1 per-tap
                pl.BlockSpec((1, 1, C), lambda i: (0, 0, 0)),        # b1
                pl.BlockSpec((1, 1, C), lambda i: (0, 0, 0)),        # gamma
                pl.BlockSpec((1, 1, C), lambda i: (0, 0, 0)),        # beta
                pl.BlockSpec((KSIZE, C, C), lambda i: (0, 0, 0)),    # w2 per-tap
                pl.BlockSpec((1, 1, C), lambda i: (0, 0, 0)),        # b2
            ],
            out_specs=pl.BlockSpec((bblk, N, C), lambda i: (i, 0, 0)),
            scratch_shapes=[pltpu.VMEM((bblk, Ns, C), matmul_dtype)],
        ),
        compiler_params=pltpu.CompilerParams(
            dimension_semantics=("parallel",),
            vmem_limit_bytes=32 * 1024 * 1024),
    )(x_in, w1k, b1r, gr, br, w2k, b2r)
    return out if Bp == B else out[:B]


def lpi_ref(x, w1, b1, gamma, beta, w2, b2):
    """Pure-JAX reference matching the PyTorch forward."""
    xt = jnp.transpose(x, (0, 2, 1))                    # (B, C, N)
    dn = ('NCH', 'OIH', 'NCH')
    y = jax.lax.conv_general_dilated(xt, w1, (1,), [(PAD, PAD)],
                                     dimension_numbers=dn) + b1[None, :, None]
    y = 0.5 * y * (1.0 + jax.lax.erf(y * jnp.float32(_INV_SQRT2)))
    mean = jnp.mean(y, axis=2, keepdims=True)
    var = jnp.mean((y - mean) ** 2, axis=2, keepdims=True)
    y = (y - mean) / jnp.sqrt(var + EPS)
    y = y * gamma[None, :, None] + beta[None, :, None]
    y = jax.lax.conv_general_dilated(y, w2, (1,), [(PAD, PAD)],
                                     dimension_numbers=dn) + b2[None, :, None]
    return jnp.transpose(y, (0, 2, 1)) + x


if __name__ == "__main__":
    B, N, C = 2, 16, 32      # (batch, tokens, channels) — in_features = out_features = C

    key = jax.random.PRNGKey(0)
    k1, k2, k3, k4, k5, k6, k7 = jax.random.split(key, 7)

    x = jax.random.normal(k1, (B, N, C), jnp.float32)
    w1 = jax.random.normal(k2, (C, C, KSIZE), jnp.float32) * 0.1   # torch (C_out, C_in, K)
    b1 = jax.random.normal(k3, (C,), jnp.float32) * 0.1
    gamma = 1.0 + 0.1 * jax.random.normal(k4, (C,), jnp.float32)
    beta = 0.1 * jax.random.normal(k5, (C,), jnp.float32)
    w2 = jax.random.normal(k6, (C, C, KSIZE), jnp.float32) * 0.1
    b2 = jax.random.normal(k7, (C,), jnp.float32) * 0.1

    out = jax.block_until_ready(lpi_pallas(x, w1, b1, gamma, beta, w2, b2))
    ref = jax.block_until_ready(lpi_ref(x, w1, b1, gamma, beta, w2, b2))

    np.testing.assert_allclose(np.asarray(out), np.asarray(ref),
                               rtol=1e-4, atol=1e-4)
    print("KERNEL_OK")
</pallas_src>

<mosaic_0001>
module attributes {stable_mosaic.version = 11 : i64} {
  func.func @lpi_kernel(%arg0: i32, %arg1: memref<2x16x32xf32, #tpu.memory_space<vmem>>, %arg2: memref<5x32x32xf32, #tpu.memory_space<vmem>>, %arg3: memref<1x1x32xf32, #tpu.memory_space<vmem>>, %arg4: memref<1x1x32xf32, #tpu.memory_space<vmem>>, %arg5: memref<1x1x32xf32, #tpu.memory_space<vmem>>, %arg6: memref<5x32x32xf32, #tpu.memory_space<vmem>>, %arg7: memref<1x1x32xf32, #tpu.memory_space<vmem>>, %arg8: memref<2x16x32xf32, #tpu.memory_space<vmem>>, %arg9: memref<2x24x32xf32, #tpu.memory_space<vmem>>) attributes {dimension_semantics = [#tpu.dimension_semantics<parallel>], iteration_bounds = array<i64: 1>, scalar_prefetch = 0 : i64, scratch_operands = 1 : i64, tpu.core_type = #tpu.core_type<tc>, window_params = [{transform_indices = @transform_0, window_bounds = array<i64: 2, 16, 32>}, {pipeline_mode = #tpu.pipeline_mode<synchronous>, transform_indices = @transform_1, window_bounds = array<i64: 5, 32, 32>}, {pipeline_mode = #tpu.pipeline_mode<synchronous>, transform_indices = @transform_2, window_bounds = array<i64: 1, 1, 32>}, {pipeline_mode = #tpu.pipeline_mode<synchronous>, transform_indices = @transform_3, window_bounds = array<i64: 1, 1, 32>}, {pipeline_mode = #tpu.pipeline_mode<synchronous>, transform_indices = @transform_4, window_bounds = array<i64: 1, 1, 32>}, {pipeline_mode = #tpu.pipeline_mode<synchronous>, transform_indices = @transform_5, window_bounds = array<i64: 5, 32, 32>}, {pipeline_mode = #tpu.pipeline_mode<synchronous>, transform_indices = @transform_6, window_bounds = array<i64: 1, 1, 32>}, {transform_indices = @transform_7, window_bounds = array<i64: 2, 16, 32>}]} {
    %cst = arith.constant 0.000000e+00 : f32
    %0 = vector.broadcast %cst : f32 to vector<2x2x32xf32>
    %c0 = arith.constant 0 : index
    %c0_0 = arith.constant 0 : index
    %c0_1 = arith.constant 0 : index
    %1 = vector.load %arg9[%c0, %c0_0, %c0_1] : memref<2x24x32xf32, #tpu.memory_space<vmem>>, vector<2x2x32xf32>
    tpu.vector_store %arg9[%c0, %c0_0, %c0_1], %0 {strides = array<i32>} : memref<2x24x32xf32, #tpu.memory_space<vmem>>, vector<2x2x32xf32>,
    %cst_2 = arith.constant 0.000000e+00 : f32
    %2 = vector.broadcast %cst_2 : f32 to vector<2x6x32xf32>
    %c0_3 = arith.constant 0 : index
    %c18 = arith.constant 18 : index
    %c0_4 = arith.constant 0 : index
    %3 = vector.load %arg9[%c0_3, %c18, %c0_4] : memref<2x24x32xf32, #tpu.memory_space<vmem>>, vector<2x6x32xf32>
    tpu.vector_store %arg9[%c0_3, %c18, %c0_4], %2 {strides = array<i32>} : memref<2x24x32xf32, #tpu.memory_space<vmem>>, vector<2x6x32xf32>,
    %c0_5 = arith.constant 0 : index
    %c0_6 = arith.constant 0 : index
    %c0_7 = arith.constant 0 : index
    %4 = vector.load %arg1[%c0_5, %c0_6, %c0_7] : memref<2x16x32xf32, #tpu.memory_space<vmem>>, vector<2x16x32xf32>
    %c0_8 = arith.constant 0 : index
    %c2 = arith.constant 2 : index
    %c0_9 = arith.constant 0 : index
    %5 = vector.load %arg9[%c0_8, %c2, %c0_9] : memref<2x24x32xf32, #tpu.memory_space<vmem>>, vector<2x16x32xf32>
    tpu.vector_store %arg9[%c0_8, %c2, %c0_9], %4 {strides = array<i32>} : memref<2x24x32xf32, #tpu.memory_space<vmem>>, vector<2x16x32xf32>,
    %c0_10 = arith.constant 0 : index
    %c0_11 = arith.constant 0 : index
    %c0_12 = arith.constant 0 : index
    %6 = vector.load %arg9[%c0_10, %c0_11, %c0_12] : memref<2x24x32xf32, #tpu.memory_space<vmem>>, vector<2x16x32xf32>
    %7 = vector.shape_cast %6 : vector<2x16x32xf32> to vector<32x32xf32>
    %c0_13 = arith.constant 0 : index
    %c0_14 = arith.constant 0 : index
    %c0_15 = arith.constant 0 : index
    %8 = vector.load %arg2[%c0_13, %c0_14, %c0_15] : memref<5x32x32xf32, #tpu.memory_space<vmem>>, vector<1x32x32xf32>
    %9 = vector.shape_cast %8 : vector<1x32x32xf32> to vector<32x32xf32>
    %cst_16 = arith.constant dense<0.000000e+00> : vector<32x32xf32>
    %10 = tpu.matmul %7, %9, %cst_16 {dimension_numbers = #tpu.dot_dimension_numbers<[1], [0], [0], [1], [0, 0, 1, 1], [], []>} : vector<32x32xf32>, vector<32x32xf32>, vector<32x32xf32> -> vector<32x32xf32>
    %c0_17 = arith.constant 0 : index
    %c1 = arith.constant 1 : index
    %c0_18 = arith.constant 0 : index
    %11 = vector.load %arg9[%c0_17, %c1, %c0_18] : memref<2x24x32xf32, #tpu.memory_space<vmem>>, vector<2x16x32xf32>
    %12 = vector.shape_cast %11 : vector<2x16x32xf32> to vector<32x32xf32>
    %c1_19 = arith.constant 1 : index
    %c0_20 = arith.constant 0 : index
    %c0_21 = arith.constant 0 : index
    %13 = vector.load %arg2[%c1_19, %c0_20, %c0_21] : memref<5x32x32xf32, #tpu.memory_space<vmem>>, vector<1x32x32xf32>
    %14 = vector.shape_cast %13 : vector<1x32x32xf32> to vector<32x32xf32>
    %cst_22 = arith.constant dense<0.000000e+00> : vector<32x32xf32>
    %15 = tpu.matmul %12, %14, %cst_22 {dimension_numbers = #tpu.dot_dimension_numbers<[1], [0], [0], [1], [0, 0, 1, 1], [], []>} : vector<32x32xf32>, vector<32x32xf32>, vector<32x32xf32> -> vector<32x32xf32>
    %16 = arith.addf %10, %15 : vector<32x32xf32>
    %c0_23 = arith.constant 0 : index
    %c2_24 = arith.constant 2 : index
    %c0_25 = arith.constant 0 : index
    %17 = vector.load %arg9[%c0_23, %c2_24, %c0_25] : memref<2x24x32xf32, #tpu.memory_space<vmem>>, vector<2x16x32xf32>
    %18 = vector.shape_cast %17 : vector<2x16x32xf32> to vector<32x32xf32>
    %c2_26 = arith.constant 2 : index
    %c0_27 = arith.constant 0 : index
    %c0_28 = arith.constant 0 : index
    %19 = vector.load %arg2[%c2_26, %c0_27, %c0_28] : memref<5x32x32xf32, #tpu.memory_space<vmem>>, vector<1x32x32xf32>
    %20 = vector.shape_cast %19 : vector<1x32x32xf32> to vector<32x32xf32>
    %cst_29 = arith.constant dense<0.000000e+00> : vector<32x32xf32>
    %21 = tpu.matmul %18, %20, %cst_29 {dimension_numbers = #tpu.dot_dimension_numbers<[1], [0], [0], [1], [0, 0, 1, 1], [], []>} : vector<32x32xf32>, vector<32x32xf32>, vector<32x32xf32> -> vector<32x32xf32>
    %22 = arith.addf %16, %21 : vector<32x32xf32>
    %c0_30 = arith.constant 0 : index
    %c3 = arith.constant 3 : index
    %c0_31 = arith.constant 0 : index
    %23 = vector.load %arg9[%c0_30, %c3, %c0_31] : memref<2x24x32xf32, #tpu.memory_space<vmem>>, vector<2x16x32xf32>
    %24 = vector.shape_cast %23 : vector<2x16x32xf32> to vector<32x32xf32>
    %c3_32 = arith.constant 3 : index
    %c0_33 = arith.constant 0 : index
    %c0_34 = arith.constant 0 : index
    %25 = vector.load %arg2[%c3_32, %c0_33, %c0_34] : memref<5x32x32xf32, #tpu.memory_space<vmem>>, vector<1x32x32xf32>
    %26 = vector.shape_cast %25 : vector<1x32x32xf32> to vector<32x32xf32>
    %cst_35 = arith.constant dense<0.000000e+00> : vector<32x32xf32>
    %27 = tpu.matmul %24, %26, %cst_35 {dimension_numbers = #tpu.dot_dimension_numbers<[1], [0], [0], [1], [0, 0, 1, 1], [], []>} : vector<32x32xf32>, vector<32x32xf32>, vector<32x32xf32> -> vector<32x32xf32>
    %28 = arith.addf %22, %27 : vector<32x32xf32>
    %c0_36 = arith.constant 0 : index
    %c4 = arith.constant 4 : index
    %c0_37 = arith.constant 0 : index
    %29 = vector.load %arg9[%c0_36, %c4, %c0_37] : memref<2x24x32xf32, #tpu.memory_space<vmem>>, vector<2x16x32xf32>
    %30 = vector.shape_cast %29 : vector<2x16x32xf32> to vector<32x32xf32>
    %c4_38 = arith.constant 4 : index
    %c0_39 = arith.constant 0 : index
    %c0_40 = arith.constant 0 : index
    %31 = vector.load %arg2[%c4_38, %c0_39, %c0_40] : memref<5x32x32xf32, #tpu.memory_space<vmem>>, vector<1x32x32xf32>
    %32 = vector.shape_cast %31 : vector<1x32x32xf32> to vector<32x32xf32>
    %cst_41 = arith.constant dense<0.000000e+00> : vector<32x32xf32>
    %33 = tpu.matmul %30, %32, %cst_41 {dimension_numbers = #tpu.dot_dimension_numbers<[1], [0], [0], [1], [0, 0, 1, 1], [], []>} : vector<32x32xf32>, vector<32x32xf32>, vector<32x32xf32> -> vector<32x32xf32>
    %34 = arith.addf %28, %33 : vector<32x32xf32>
    %35 = vector.shape_cast %34 : vector<32x32xf32> to vector<2x16x32xf32>
    %c0_42 = arith.constant 0 : index
    %c0_43 = arith.constant 0 : index
    %c0_44 = arith.constant 0 : index
    %36 = vector.load %arg3[%c0_42, %c0_43, %c0_44] : memref<1x1x32xf32, #tpu.memory_space<vmem>>, vector<1x1x32xf32>
    %37 = vector.broadcast %36 : vector<1x1x32xf32> to vector<2x16x32xf32>
    %38 = arith.addf %35, %37 : vector<2x16x32xf32>
    %cst_45 = arith.constant 5.000000e-01 : f32
    %39 = vector.broadcast %cst_45 : f32 to vector<2x16x32xf32>
    %40 = arith.mulf %39, %38 : vector<2x16x32xf32>
    %cst_46 = arith.constant 0.707106769 : f32
    %41 = vector.broadcast %cst_46 : f32 to vector<2x16x32xf32>
    %42 = arith.mulf %38, %41 : vector<2x16x32xf32>
    %43 = math.erf %42 : vector<2x16x32xf32>
    %cst_47 = arith.constant 1.000000e+00 : f32
    %44 = vector.broadcast %cst_47 : f32 to vector<2x16x32xf32>
    %45 = arith.addf %44, %43 : vector<2x16x32xf32>
    %46 = arith.mulf %40, %45 : vector<2x16x32xf32>
    %cst_48 = arith.constant dense<0.000000e+00> : vector<2x32xf32>
    %47 = vector.multi_reduction <add>, %46, %cst_48 [1] : vector<2x16x32xf32> to vector<2x32xf32>
    %48 = vector.shape_cast %47 : vector<2x32xf32> to vector<2x1x32xf32>
    %cst_49 = arith.constant 1.600000e+01 : f32
    %49 = vector.broadcast %cst_49 : f32 to vector<2x1x32xf32>
    %50 = arith.divf %48, %49 : vector<2x1x32xf32>
    %51 = vector.broadcast %50 : vector<2x1x32xf32> to vector<2x16x32xf32>
    %52 = arith.subf %46, %51 : vector<2x16x32xf32>
    %53 = arith.mulf %52, %52 : vector<2x16x32xf32>
    %cst_50 = arith.constant dense<0.000000e+00> : vector<2x32xf32>
    %54 = vector.multi_reduction <add>, %53, %cst_50 [1] : vector<2x16x32xf32> to vector<2x32xf32>
    %55 = vector.shape_cast %54 : vector<2x32xf32> to vector<2x1x32xf32>
    %cst_51 = arith.constant 1.600000e+01 : f32
    %56 = vector.broadcast %cst_51 : f32 to vector<2x1x32xf32>
    %57 = arith.divf %55, %56 : vector<2x1x32xf32>
    %cst_52 = arith.constant 9.99999974E-6 : f32
    %58 = vector.broadcast %cst_52 : f32 to vector<2x1x32xf32>
    %59 = arith.addf %57, %58 : vector<2x1x32xf32>
    %60 = math.rsqrt %59 : vector<2x1x32xf32>
    %61 = vector.broadcast %60 : vector<2x1x32xf32> to vector<2x16x32xf32>
    %62 = arith.mulf %52, %61 : vector<2x16x32xf32>
    %c0_53 = arith.constant 0 : index
    %c0_54 = arith.constant 0 : index
    %c0_55 = arith.constant 0 : index
    %63 = vector.load %arg4[%c0_53, %c0_54, %c0_55] : memref<1x1x32xf32, #tpu.memory_space<vmem>>, vector<1x1x32xf32>
    %64 = vector.broadcast %63 : vector<1x1x32xf32> to vector<2x16x32xf32>
    %65 = arith.mulf %62, %64 : vector<2x16x32xf32>
    %c0_56 = arith.constant 0 : index
    %c0_57 = arith.constant 0 : index
    %c0_58 = arith.constant 0 : index
    %66 = vector.load %arg5[%c0_56, %c0_57, %c0_58] : memref<1x1x32xf32, #tpu.memory_space<vmem>>, vector<1x1x32xf32>
    %67 = vector.broadcast %66 : vector<1x1x32xf32> to vector<2x16x32xf32>
    %68 = arith.addf %65, %67 : vector<2x16x32xf32>
    %c0_59 = arith.constant 0 : index
    %c2_60 = arith.constant 2 : index
    %c0_61 = arith.constant 0 : index
    %69 = vector.load %arg9[%c0_59, %c2_60, %c0_61] : memref<2x24x32xf32, #tpu.memory_space<vmem>>, vector<2x16x32xf32>
    tpu.vector_store %arg9[%c0_59, %c2_60, %c0_61], %68 {strides = array<i32>} : memref<2x24x32xf32, #tpu.memory_space<vmem>>, vector<2x16x32xf32>,
    %c0_62 = arith.constant 0 : index
    %c0_63 = arith.constant 0 : index
    %c0_64 = arith.constant 0 : index
    %70 = vector.load %arg9[%c0_62, %c0_63, %c0_64] : memref<2x24x32xf32, #tpu.memory_space<vmem>>, vector<2x16x32xf32>
    %71 = vector.shape_cast %70 : vector<2x16x32xf32> to vector<32x32xf32>
    %c0_65 = arith.constant 0 : index
    %c0_66 = arith.constant 0 : index
    %c0_67 = arith.constant 0 : index
    %72 = vector.load %arg6[%c0_65, %c0_66, %c0_67] : memref<5x32x32xf32, #tpu.memory_space<vmem>>, vector<1x32x32xf32>
    %73 = vector.shape_cast %72 : vector<1x32x32xf32> to vector<32x32xf32>
    %cst_68 = arith.constant dense<0.000000e+00> : vector<32x32xf32>
    %74 = tpu.matmul %71, %73, %cst_68 {dimension_numbers = #tpu.dot_dimension_numbers<[1], [0], [0], [1], [0, 0, 1, 1], [], []>} : vector<32x32xf32>, vector<32x32xf32>, vector<32x32xf32> -> vector<32x32xf32>
    %c0_69 = arith.constant 0 : index
    %c1_70 = arith.constant 1 : index
    %c0_71 = arith.constant 0 : index
    %75 = vector.load %arg9[%c0_69, %c1_70, %c0_71] : memref<2x24x32xf32, #tpu.memory_space<vmem>>, vector<2x16x32xf32>
    %76 = vector.shape_cast %75 : vector<2x16x32xf32> to vector<32x32xf32>
    %c1_72 = arith.constant 1 : index
    %c0_73 = arith.constant 0 : index
    %c0_74 = arith.constant 0 : index
    %77 = vector.load %arg6[%c1_72, %c0_73, %c0_74] : memref<5x32x32xf32, #tpu.memory_space<vmem>>, vector<1x32x32xf32>
    %78 = vector.shape_cast %77 : vector<1x32x32xf32> to vector<32x32xf32>
    %cst_75 = arith.constant dense<0.000000e+00> : vector<32x32xf32>
    %79 = tpu.matmul %76, %78, %cst_75 {dimension_numbers = #tpu.dot_dimension_numbers<[1], [0], [0], [1], [0, 0, 1, 1], [], []>} : vector<32x32xf32>, vector<32x32xf32>, vector<32x32xf32> -> vector<32x32xf32>
    %80 = arith.addf %74, %79 : vector<32x32xf32>
    %c0_76 = arith.constant 0 : index
    %c2_77 = arith.constant 2 : index
    %c0_78 = arith.constant 0 : index
    %81 = vector.load %arg9[%c0_76, %c2_77, %c0_78] : memref<2x24x32xf32, #tpu.memory_space<vmem>>, vector<2x16x32xf32>
    %82 = vector.shape_cast %81 : vector<2x16x32xf32> to vector<32x32xf32>
    %c2_79 = arith.constant 2 : index
    %c0_80 = arith.constant 0 : index
    %c0_81 = arith.constant 0 : index
    %83 = vector.load %arg6[%c2_79, %c0_80, %c0_81] : memref<5x32x32xf32, #tpu.memory_space<vmem>>, vector<1x32x32xf32>
    %84 = vector.shape_cast %83 : vector<1x32x32xf32> to vector<32x32xf32>
    %cst_82 = arith.constant dense<0.000000e+00> : vector<32x32xf32>
    %85 = tpu.matmul %82, %84, %cst_82 {dimension_numbers = #tpu.dot_dimension_numbers<[1], [0], [0], [1], [0, 0, 1, 1], [], []>} : vector<32x32xf32>, vector<32x32xf32>, vector<32x32xf32> -> vector<32x32xf32>
    %86 = arith.addf %80, %85 : vector<32x32xf32>
    %c0_83 = arith.constant 0 : index
    %c3_84 = arith.constant 3 : index
    %c0_85 = arith.constant 0 : index
    %87 = vector.load %arg9[%c0_83, %c3_84, %c0_85] : memref<2x24x32xf32, #tpu.memory_space<vmem>>, vector<2x16x32xf32>
    %88 = vector.shape_cast %87 : vector<2x16x32xf32> to vector<32x32xf32>
    %c3_86 = arith.constant 3 : index
    %c0_87 = arith.constant 0 : index
    %c0_88 = arith.constant 0 : index
    %89 = vector.load %arg6[%c3_86, %c0_87, %c0_88] : memref<5x32x32xf32, #tpu.memory_space<vmem>>, vector<1x32x32xf32>
    %90 = vector.shape_cast %89 : vector<1x32x32xf32> to vector<32x32xf32>
    %cst_89 = arith.constant dense<0.000000e+00> : vector<32x32xf32>
    %91 = tpu.matmul %88, %90, %cst_89 {dimension_numbers = #tpu.dot_dimension_numbers<[1], [0], [0], [1], [0, 0, 1, 1], [], []>} : vector<32x32xf32>, vector<32x32xf32>, vector<32x32xf32> -> vector<32x32xf32>
    %92 = arith.addf %86, %91 : vector<32x32xf32>
    %c0_90 = arith.constant 0 : index
    %c4_91 = arith.constant 4 : index
    %c0_92 = arith.constant 0 : index
    %93 = vector.load %arg9[%c0_90, %c4_91, %c0_92] : memref<2x24x32xf32, #tpu.memory_space<vmem>>, vector<2x16x32xf32>
    %94 = vector.shape_cast %93 : vector<2x16x32xf32> to vector<32x32xf32>
    %c4_93 = arith.constant 4 : index
    %c0_94 = arith.constant 0 : index
    %c0_95 = arith.constant 0 : index
    %95 = vector.load %arg6[%c4_93, %c0_94, %c0_95] : memref<5x32x32xf32, #tpu.memory_space<vmem>>, vector<1x32x32xf32>
    %96 = vector.shape_cast %95 : vector<1x32x32xf32> to vector<32x32xf32>
    %cst_96 = arith.constant dense<0.000000e+00> : vector<32x32xf32>
    %97 = tpu.matmul %94, %96, %cst_96 {dimension_numbers = #tpu.dot_dimension_numbers<[1], [0], [0], [1], [0, 0, 1, 1], [], []>} : vector<32x32xf32>, vector<32x32xf32>, vector<32x32xf32> -> vector<32x32xf32>
    %98 = arith.addf %92, %97 : vector<32x32xf32>
    %99 = vector.shape_cast %98 : vector<32x32xf32> to vector<2x16x32xf32>
    %c0_97 = arith.constant 0 : index
    %c0_98 = arith.constant 0 : index
    %c0_99 = arith.constant 0 : index
    %100 = vector.load %arg7[%c0_97, %c0_98, %c0_99] : memref<1x1x32xf32, #tpu.memory_space<vmem>>, vector<1x1x32xf32>
    %101 = vector.broadcast %100 : vector<1x1x32xf32> to vector<2x16x32xf32>
    %102 = arith.addf %99, %101 : vector<2x16x32xf32>
    %c0_100 = arith.constant 0 : index
    %c0_101 = arith.constant 0 : index
    %c0_102 = arith.constant 0 : index
    %103 = vector.load %arg1[%c0_100, %c0_101, %c0_102] : memref<2x16x32xf32, #tpu.memory_space<vmem>>, vector<2x16x32xf32>
    %104 = arith.addf %102, %103 : vector<2x16x32xf32>
    %c0_103 = arith.constant 0 : index
    %c0_104 = arith.constant 0 : index
    %c0_105 = arith.constant 0 : index
    %105 = vector.load %arg8[%c0_103, %c0_104, %c0_105] : memref<2x16x32xf32, #tpu.memory_space<vmem>>, vector<2x16x32xf32>
    tpu.vector_store %arg8[%c0_103, %c0_104, %c0_105], %104 {strides = array<i32>} : memref<2x16x32xf32, #tpu.memory_space<vmem>>, vector<2x16x32xf32>,
    return
  }
  func.func @transform_0(%arg0: i32) -> (i32, i32, i32) {
    %c0_i32 = arith.constant 0 : i32
    %c0_i32_0 = arith.constant 0 : i32
    %c0_i32_1 = arith.constant 0 : i32
    return %arg0, %c0_i32, %c0_i32_0 : i32, i32, i32
  }
  func.func @transform_1(%arg0: i32) -> (i32, i32, i32) {
    %c0_i32 = arith.constant 0 : i32
    %c0_i32_0 = arith.constant 0 : i32
    %c0_i32_1 = arith.constant 0 : i32
    %c0_i32_2 = arith.constant 0 : i32
    return %c0_i32, %c0_i32_0, %c0_i32_1 : i32, i32, i32
  }
  func.func @transform_2(%arg0: i32) -> (i32, i32, i32) {
    %c0_i32 = arith.constant 0 : i32
    %c0_i32_0 = arith.constant 0 : i32
    %c0_i32_1 = arith.constant 0 : i32
    %c0_i32_2 = arith.constant 0 : i32
    return %c0_i32, %c0_i32_0, %c0_i32_1 : i32, i32, i32
  }
  func.func @transform_3(%arg0: i32) -> (i32, i32, i32) {
    %c0_i32 = arith.constant 0 : i32
    %c0_i32_0 = arith.constant 0 : i32
    %c0_i32_1 = arith.constant 0 : i32
    %c0_i32_2 = arith.constant 0 : i32
    return %c0_i32, %c0_i32_0, %c0_i32_1 : i32, i32, i32
  }
  func.func @transform_4(%arg0: i32) -> (i32, i32, i32) {
    %c0_i32 = arith.constant 0 : i32
    %c0_i32_0 = arith.constant 0 : i32
    %c0_i32_1 = arith.constant 0 : i32
    %c0_i32_2 = arith.constant 0 : i32
    return %c0_i32, %c0_i32_0, %c0_i32_1 : i32, i32, i32
  }
  func.func @transform_5(%arg0: i32) -> (i32, i32, i32) {
    %c0_i32 = arith.constant 0 : i32
    %c0_i32_0 = arith.constant 0 : i32
    %c0_i32_1 = arith.constant 0 : i32
    %c0_i32_2 = arith.constant 0 : i32
    return %c0_i32, %c0_i32_0, %c0_i32_1 : i32, i32, i32
  }
  func.func @transform_6(%arg0: i32) -> (i32, i32, i32) {
    %c0_i32 = arith.constant 0 : i32
    %c0_i32_0 = arith.constant 0 : i32
    %c0_i32_1 = arith.constant 0 : i32
    %c0_i32_2 = arith.constant 0 : i32
    return %c0_i32, %c0_i32_0, %c0_i32_1 : i32, i32, i32
  }
  func.func @transform_7(%arg0: i32) -> (i32, i32, i32) {
    %c0_i32 = arith.constant 0 : i32
    %c0_i32_0 = arith.constant 0 : i32
    %c0_i32_1 = arith.constant 0 : i32
    return %arg0, %c0_i32, %c0_i32_0 : i32, i32, i32
  }
}

</mosaic_0001>

<llo_original>
// kernel: tpu_custom_call.1
$region0: #{tpu_custom_call.1}
  #allocation0 [shape = 'u32[]', space=smem, size = 0x4, offset = 0x4, fixed_abs, tag = 'smem constant byte address 0x4 - core index']
  #allocation1 [shape = 'u32[144,128]{1,0:T(1,128)}', space=vmem, size = 0x12000, scoped, tag = 'internal scratch']
  #allocation2 [shape = 'f32[2,24,32]{2,1,0:T(8,128)}', space=vmem, size = 0x6000, scoped, tag = 'scratch operand']
  %s0 = inlined_call_operand.hbm [shape: f32[2,16,32], index: 0, kind: input, shape index: {}]
  %s1 = inlined_call_operand.hbm [shape: f32[5,32,32], index: 1, kind: input, shape index: {}]
  %s2 = inlined_call_operand.vmem [shape: f32[1,1,32], index: 2, kind: input, shape index: {}]
  %s3 = inlined_call_operand.vmem [shape: f32[1,1,32], index: 3, kind: input, shape index: {}]
  %s4 = inlined_call_operand.vmem [shape: f32[1,1,32], index: 4, kind: input, shape index: {}]
  %s5 = inlined_call_operand.hbm [shape: f32[5,32,32], index: 5, kind: input, shape index: {}]
  %s6 = inlined_call_operand.vmem [shape: f32[1,1,32], index: 6, kind: input, shape index: {}]
  %s7 = inlined_call_operand.hbm [shape: f32[2,16,32], index: 7, kind: output, shape index: {}]
  %s8 = sld [smem:[#allocation0]]
  $region50: #{tpu_custom_call.1} parent=0
    _
  %s10 = ssub.s32 1, %s8
  %s11 = scalar_select 0, %s10, %s8
  $region1: #{tpu_custom_call.1} parent=0
    #allocation3 [shape = 'u8[16384]{0}', space=vmem, size = 0x4000, scoped, tag = 'input window, operand 0, single buffered']
    #allocation4 [shape = 's32[1]{0}', space=sflag, size = 0x4, scoped, tag = 'scoped memory for tpu_custom_call.1']
    #allocation5 [shape = 's32[1]{0}', space=sflag, size = 0x4, scoped, tag = 'scoped memory for tpu_custom_call.1']
    #allocation6 [shape = 'u8[81920]{0}', space=vmem, size = 0x14000, scoped, tag = 'input window, operand 1, single buffered']
    #allocation7 [shape = 's32[1]{0}', space=sflag, size = 0x4, scoped, tag = 'scoped memory for tpu_custom_call.1']
    #allocation8 [shape = 'u8[81920]{0}', space=vmem, size = 0x14000, scoped, tag = 'input window, operand 5, single buffered']
    #allocation9 [shape = 'u8[16384]{0}', space=vmem, size = 0x4000, scoped, tag = 'output window, operand 0, single buffered']
    %12 = vsyncpa [#allocation4], 0
    %13 = vsyncpa [#allocation7], 0
    %14 = vsyncpa [#allocation5], 0
    // Predicated region
    $region2: #{tpu_custom_call.1} parent=1 // pred_check
      _
    $region3: #{tpu_custom_call.1} parent=1 // pred_check_branch
      %16 = sbr.rel (0) target = $region5
    $region4: #{tpu_custom_call.1} parent=1 // pred_region
      %s18 = ssub.s32 512, 512
      %19 = vsyncadd [#allocation4], %s18
      %s20 = sshll.u32 [#allocation3], 4
      %s21 = int_to_ptr.vmem [resolvable:$true] %s20
      %26 = dma.hbm_to_vmem [thread:$0]  %s0, 512, %s21, [#allocation4], 128, 128, 8
    $region5: #{tpu_custom_call.1} parent=1 // pred_fallthru
      _
    // Predicated region
    $region6: #{tpu_custom_call.1} parent=1 // pred_check
      _
    $region7: #{tpu_custom_call.1} parent=1 // pred_check_branch
      %28 = sbr.rel (0) target = $region9
    $region8: #{tpu_custom_call.1} parent=1 // pred_region
      %s30 = ssub.s32 2560, 2560
      %31 = vsyncadd [#allocation7], %s30
      %s32 = sshll.u32 [#allocation6], 4
      %s33 = int_to_ptr.vmem [resolvable:$true] %s32
      %38 = dma.hbm_to_vmem [thread:$0]  %s1, 2560, %s33, [#allocation7], 128, 128, 8
    $region9: #{tpu_custom_call.1} parent=1 // pred_fallthru
      _
    // Predicated region
    $region10: #{tpu_custom_call.1} parent=1 // pred_check
      _
    $region11: #{tpu_custom_call.1} parent=1 // pred_check_branch
      %40 = sbr.rel (0) target = $region13
    $region12: #{tpu_custom_call.1} parent=1 // pred_region
      _
    $region13: #{tpu_custom_call.1} parent=1 // pred_fallthru
      _
    // Predicated region
    $region14: #{tpu_custom_call.1} parent=1 // pred_check
      _
    $region15: #{tpu_custom_call.1} parent=1 // pred_check_branch
      %42 = sbr.rel (0) target = $region17
    $region16: #{tpu_custom_call.1} parent=1 // pred_region
      _
    $region17: #{tpu_custom_call.1} parent=1 // pred_fallthru
      _
    // Predicated region
    $region18: #{tpu_custom_call.1} parent=1 // pred_check
      _
    $region19: #{tpu_custom_call.1} parent=1 // pred_check_branch
      %44 = sbr.rel (0) target = $region21
    $region20: #{tpu_custom_call.1} parent=1 // pred_region
      _
    $region21: #{tpu_custom_call.1} parent=1 // pred_fallthru
      _
    // Predicated region
    $region22: #{tpu_custom_call.1} parent=1 // pred_check
      _
    $region23: #{tpu_custom_call.1} parent=1 // pred_check_branch
      %46 = sbr.rel (0) target = $region25
    $region24: #{tpu_custom_call.1} parent=1 // pred_region
      %s48 = ssub.s32 2560, 2560
      %49 = vsyncadd [#allocation7], %s48
      %s50 = sshll.u32 [#allocation8], 4
      %s51 = int_to_ptr.vmem [resolvable:$true] %s50
      %56 = dma.hbm_to_vmem [thread:$0]  %s5, 2560, %s51, [#allocation7], 128, 128, 8
    $region25: #{tpu_custom_call.1} parent=1 // pred_fallthru
      _
    // Predicated region
    $region26: #{tpu_custom_call.1} parent=1 // pred_check
      _
    $region27: #{tpu_custom_call.1} parent=1 // pred_check_branch
      %58 = sbr.rel (0) target = $region29
    $region28: #{tpu_custom_call.1} parent=1 // pred_region
      _
    $region29: #{tpu_custom_call.1} parent=1 // pred_fallthru
      _
    // Predicated region
    $region30: #{tpu_custom_call.1} parent=1 // pred_check
      _
    $region31: #{tpu_custom_call.1} parent=1 // pred_check_branch
      %60 = sbr.rel (0) target = $region33
    $region32: #{tpu_custom_call.1} parent=1 // pred_region
      %61 = dma.done [#allocation4], 512
    $region33: #{tpu_custom_call.1} parent=1 // pred_fallthru
      _
    // Predicated region
    $region34: #{tpu_custom_call.1} parent=1 // pred_check
      _
    $region35: #{tpu_custom_call.1} parent=1 // pred_check_branch
      %63 = sbr.rel (0) target = $region37
    $region36: #{tpu_custom_call.1} parent=1 // pred_region
      %64 = dma.done [#allocation7], 2560
    $region37: #{tpu_custom_call.1} parent=1 // pred_fallthru
      _
    // Predicated region
    $region38: #{tpu_custom_call.1} parent=1 // pred_check
      _
    $region39: #{tpu_custom_call.1} parent=1 // pred_check_branch
      %66 = sbr.rel (0) target = $region41
    $region40: #{tpu_custom_call.1} parent=1 // pred_region
      %67 = dma.done [#allocation7], 2560
    $region41: #{tpu_custom_call.1} parent=1 // pred_fallthru
      _
    %vm68 = vcmask 254976
    %69 = vst.msk [vmem:[#allocation2] sm:$0x3] %vm68, 0.0
    %70 = vst.msk [vmem:[#allocation2 + $0x18] sm:$0x3] %vm68, 0.0
    %vm71 = vcmask 259072
    %72 = vst.msk [vmem:[#allocation2 + $0x12] sm:$0x3f] %vm71, 0.0
    %73 = vst.msk [vmem:[#allocation2 + $0x2a] sm:$0x3f] %vm71, 0.0
    %v74 = vld [vmem:[#allocation3] sm:$0xff]
    %v75 = vld [vmem:[#allocation3 + $0x8] sm:$0xff]
    %v76 = vld [vmem:[#allocation3 + $0x10] sm:$0xff]
    %v77 = vld [vmem:[#allocation3 + $0x18] sm:$0xff]
    %vm78 = vcmask 261120
    %79 = vst.msk [vmem:[#allocation2 + $0x2] sm:$0xff] %vm78, %v74
    %80 = vst.msk [vmem:[#allocation2 + $0xa] sm:$0xff] %vm78, %v75
    %81 = vst.msk [vmem:[#allocation2 + $0x1a] sm:$0xff] %vm78, %v76
    %82 = vst.msk [vmem:[#allocation2 + $0x22] sm:$0xff] %vm78, %v77
    %v83 = vld [vmem:[#allocation2] sm:$0xff]
    %v84 = vld [vmem:[#allocation2 + $0x8] sm:$0xff]
    %v85 = vld [vmem:[#allocation2 + $0x18] sm:$0xff]
    %v86 = vld [vmem:[#allocation2 + $0x20] sm:$0xff]
    %v87 = vld [vmem:[#allocation6] sm:$0xff]
    %v88 = vld [vmem:[#allocation6 + $0x8] sm:$0xff]
    %v89 = vld [vmem:[#allocation6 + $0x10] sm:$0xff]
    %v90 = vld [vmem:[#allocation6 + $0x18] sm:$0xff]
    %v91 = vld [vmem:[#allocation2 + $0x1] sm:$0xff]
    %v92 = vld [vmem:[#allocation2 + $0x9] sm:$0xff]
    %v93 = vld [vmem:[#allocation2 + $0x19] sm:$0xff]
    %v94 = vld [vmem:[#allocation2 + $0x21] sm:$0xff]
    %s95 = scalar_lea.vmem [#allocation6], 32
    %v96 = vld [vmem:[%s95] sm:$0xff]
    %v97 = vld [vmem:[%s95 + $0x8] sm:$0xff]
    %v98 = vld [vmem:[%s95 + $0x10] sm:$0xff]
    %v99 = vld [vmem:[%s95 + $0x18] sm:$0xff]
    %v101 = vsel %vm78, %v91, 0
    %v104 = vsel %vm78, %v92, 0
    %v107 = vsel %vm78, %v93, 0
    %v110 = vsel %vm78, %v94, 0
    %112 = vmatprep.subr.mxu0 0.0
    %113 = vmatpush1.msra.mxu0 %v96
    %114 = vmatprep.subr.mxu0 0.0
    %115 = vmatpush1.msra.mxu0 %v97
    %116 = vmatprep.subr.mxu0 0.0
    %117 = vmatpush1.msra.mxu0 %v98
    %118 = vmatprep.subr.mxu0 0.0
    %119 = vmatpush1.msra.mxu0 %v99
    %120 = vmatprep.subr.mxu0 0.0
    %121 = vmatpush1.msra.mxu0 0.0
    %122 = vmatprep.subr.mxu0 0.0
    %123 = vmatpush1.msra.mxu0 0.0
    %124 = vmatprep.subr.mxu0 0.0
    %125 = vmatpush1.msra.mxu0 0.0
    %126 = vmatprep.subr.mxu0 0.0
    %127 = vmatpush1.msra.mxu0 0.0
    %128 = vmatprep.subr.mxu0 0.0
    %129 = vmatpush1.msra.mxu0 0.0
    %130 = vmatprep.subr.mxu0 0.0
    %131 = vmatpush1.msra.mxu0 0.0
    %132 = vmatprep.subr.mxu0 0.0
    %133 = vmatpush1.msra.mxu0 0.0
    %134 = vmatprep.subr.mxu0 0.0
    %135 = vmatpush1.msra.mxu0 0.0
    %136 = vmatprep.subr.mxu0 0.0
    %137 = vmatpush1.msra.mxu0 0.0
    %138 = vmatprep.subr.mxu0 0.0
    %139 = vmatpush1.msra.mxu0 0.0
    %140 = vmatprep.subr.mxu0 0.0
    %141 = vmatpush1.msra.mxu0 0.0
    %142 = vmatprep.subr.mxu0 0.0
    %143 = vmatpush1.msra.mxu0 0.0
    %144 = vmatprep.subr.mxu0 0.0
    %145 = vmatpush1.msra.mxu0 0.0
    %146 = vmatprep.subr.mxu0 0.0
    %147 = vmatpush1.msra.mxu0 0.0
    %148 = vmatprep.subr.mxu0 0.0
    %149 = vmatpush1.msra.mxu0 0.0
    %150 = vmatprep.subr.mxu0 0.0
    %151 = vmatpush1.msra.mxu0 0.0
    %152 = vmatprep.subr.mxu0 0.0
    %153 = vmatpush1.msra.mxu0 0.0
    %154 = vmatprep.subr.mxu0 0.0
    %155 = vmatpush1.msra.mxu0 0.0
    %156 = vmatprep.subr.mxu0 0.0
    %157 = vmatpush1.msra.mxu0 0.0
    %158 = vmatprep.subr.mxu0 0.0
    %159 = vmatpush1.msra.mxu0 0.0
    %160 = vmatprep.subr.mxu0 0.0
    %161 = vmatpush1.msra.mxu0 0.0
    %162 = vmatprep.subr.mxu0 0.0
    %163 = vmatpush1.msra.mxu0 0.0
    %164 = vmatprep.subr.mxu0 0.0
    %165 = vmatpush1.msra.mxu0 0.0
    %166 = vmatprep.subr.mxu0 0.0
    %167 = vmatpush1.msra.mxu0 0.0
    %168 = vmatprep.subr.mxu0 0.0
    %169 = vmatpush1.msra.mxu0 0.0
    %170 = vmatprep.subr.mxu0 0.0
    %171 = vmatpush1.msra.mxu0 0.0
    %172 = vmatprep.subr.mxu0 0.0
    %173 = vmatpush1.msra.mxu0 0.0
    %174 = vmatprep.subr.mxu0 0.0
    %175 = vmatpush1.msra.mxu0 0.0
    %176 = vmatprep.mubr.f32.mxu0 0.0
    %177 = vmatmul.mubr.f32.gmra.mrb[0].mxu0 %v101
    %v178 = vpop.f32.mrb[0].mxu0
    %v179 = vadd.f32 0.0, %v178
    %v180 = vpop.f32.mrb[0].mxu0
    %181 = vmatprep.mubr.f32.mxu0 0.0
    %182 = vmatmul.mubr.f32.gmra.mrb[0].mxu0 %v104
    %v183 = vpop.f32.mrb[0].mxu0
    %v184 = vadd.f32 0.0, %v183
    %v185 = vpop.f32.mrb[0].mxu0
    %186 = vmatprep.mubr.f32.mxu0 0.0
    %187 = vmatmul.mubr.f32.gmra.mrb[0].mxu0 %v107
    %v188 = vpop.f32.mrb[0].mxu0
    %v189 = vadd.f32 0.0, %v188
    %v190 = vpop.f32.mrb[0].mxu0
    %191 = vmatprep.mubr.f32.mxu0 0.0
    %192 = vmatmul.mubr.f32.gmra.mrb[0].mxu0 %v110
    %v193 = vpop.f32.mrb[0].mxu0
    %v194 = vadd.f32 0.0, %v193
    %v195 = vpop.f32.mrb[0].mxu0
    %196 = vdwg.mxu0
    %v198 = vsel %vm78, %v83, 0
    %v201 = vsel %vm78, %v84, 0
    %v204 = vsel %vm78, %v85, 0
    %v207 = vsel %vm78, %v86, 0
    %209 = vmatprep.subr.mxu0 0.0
    %210 = vmatpush1.msra.mxu0 %v87
    %211 = vmatprep.subr.mxu0 0.0
    %212 = vmatpush1.msra.mxu0 %v88
    %213 = vmatprep.subr.mxu0 0.0
    %214 = vmatpush1.msra.mxu0 %v89
    %215 = vmatprep.subr.mxu0 0.0
    %216 = vmatpush1.msra.mxu0 %v90
    %217 = vmatprep.subr.mxu0 0.0
    %218 = vmatpush1.msra.mxu0 0.0
    %219 = vmatprep.subr.mxu0 0.0
    %220 = vmatpush1.msra.mxu0 0.0
    %221 = vmatprep.subr.mxu0 0.0
    %222 = vmatpush1.msra.mxu0 0.0
    %223 = vmatprep.subr.mxu0 0.0
    %224 = vmatpush1.msra.mxu0 0.0
    %225 = vmatprep.subr.mxu0 0.0
    %226 = vmatpush1.msra.mxu0 0.0
    %227 = vmatprep.subr.mxu0 0.0
    %228 = vmatpush1.msra.mxu0 0.0
    %229 = vmatprep.subr.mxu0 0.0
    %230 = vmatpush1.msra.mxu0 0.0
    %231 = vmatprep.subr.mxu0 0.0
    %232 = vmatpush1.msra.mxu0 0.0
    %233 = vmatprep.subr.mxu0 0.0
    %234 = vmatpush1.msra.mxu0 0.0
    %235 = vmatprep.subr.mxu0 0.0
    %236 = vmatpush1.msra.mxu0 0.0
    %237 = vmatprep.subr.mxu0 0.0
    %238 = vmatpush1.msra.mxu0 0.0
    %239 = vmatprep.subr.mxu0 0.0
    %240 = vmatpush1.msra.mxu0 0.0
    %241 = vmatprep.subr.mxu0 0.0
    %242 = vmatpush1.msra.mxu0 0.0
    %243 = vmatprep.subr.mxu0 0.0
    %244 = vmatpush1.msra.mxu0 0.0
    %245 = vmatprep.subr.mxu0 0.0
    %246 = vmatpush1.msra.mxu0 0.0
    %247 = vmatprep.subr.mxu0 0.0
    %248 = vmatpush1.msra.mxu0 0.0
    %249 = vmatprep.subr.mxu0 0.0
    %250 = vmatpush1.msra.mxu0 0.0
    %251 = vmatprep.subr.mxu0 0.0
    %252 = vmatpush1.msra.mxu0 0.0
    %253 = vmatprep.subr.mxu0 0.0
    %254 = vmatpush1.msra.mxu0 0.0
    %255 = vmatprep.subr.mxu0 0.0
    %256 = vmatpush1.msra.mxu0 0.0
    %257 = vmatprep.subr.mxu0 0.0
    %258 = vmatpush1.msra.mxu0 0.0
    %259 = vmatprep.subr.mxu0 0.0
    %260 = vmatpush1.msra.mxu0 0.0
    %261 = vmatprep.subr.mxu0 0.0
    %262 = vmatpush1.msra.mxu0 0.0
    %263 = vmatprep.subr.mxu0 0.0
    %264 = vmatpush1.msra.mxu0 0.0
    %265 = vmatprep.subr.mxu0 0.0
    %266 = vmatpush1.msra.mxu0 0.0
    %267 = vmatprep.subr.mxu0 0.0
    %268 = vmatpush1.msra.mxu0 0.0
    %269 = vmatprep.subr.mxu0 0.0
    %270 = vmatpush1.msra.mxu0 0.0
    %271 = vmatprep.subr.mxu0 0.0
    %272 = vmatpush1.msra.mxu0 0.0
    %273 = vmatprep.mubr.f32.mxu0 0.0
    %274 = vmatmul.mubr.f32.gmra.mrb[0].mxu0 %v198
    %v275 = vpop.f32.mrb[0].mxu0
    %v276 = vadd.f32 %v179, %v275
    %v277 = vpop.f32.mrb[0].mxu0
    %278 = vmatprep.mubr.f32.mxu0 0.0
    %279 = vmatmul.mubr.f32.gmra.mrb[0].mxu0 %v201
    %v280 = vpop.f32.mrb[0].mxu0
    %v281 = vadd.f32 %v184, %v280
    %v282 = vpop.f32.mrb[0].mxu0
    %283 = vmatprep.mubr.f32.mxu0 0.0
    %284 = vmatmul.mubr.f32.gmra.mrb[0].mxu0 %v204
    %v285 = vpop.f32.mrb[0].mxu0
    %v286 = vadd.f32 %v189, %v285
    %v287 = vpop.f32.mrb[0].mxu0
    %288 = vmatprep.mubr.f32.mxu0 0.0
    %289 = vmatmul.mubr.f32.gmra.mrb[0].mxu0 %v207
    %v290 = vpop.f32.mrb[0].mxu0
    %v291 = vadd.f32 %v194, %v290
    %v292 = vpop.f32.mrb[0].mxu0
    %293 = vdwg.mxu0
    %v294 = vld [vmem:[#allocation2 + $0x2] sm:$0xff]
    %v295 = vld [vmem:[#allocation2 + $0xa] sm:$0xff]
    %v296 = vld [vmem:[#allocation2 + $0x1a] sm:$0xff]
    %v297 = vld [vmem:[#allocation2 + $0x22] sm:$0xff]
    %s298 = scalar_lea.vmem [#allocation6], 64
    %v299 = vld [vmem:[%s298] sm:$0xff]
    %v300 = vld [vmem:[%s298 + $0x8] sm:$0xff]
    %v301 = vld [vmem:[%s298 + $0x10] sm:$0xff]
    %v302 = vld [vmem:[%s298 + $0x18] sm:$0xff]
    %v304 = vsel %vm78, %v294, 0
    %v307 = vsel %vm78, %v295, 0
    %v310 = vsel %vm78, %v296, 0
    %v313 = vsel %vm78, %v297, 0
    %315 = vmatprep.subr.mxu0 0.0
    %316 = vmatpush1.msra.mxu0 %v299
    %317 = vmatprep.subr.mxu0 0.0
    %318 = vmatpush1.msra.mxu0 %v300
    %319 = vmatprep.subr.mxu0 0.0
    %320 = vmatpush1.msra.mxu0 %v301
    %321 = vmatprep.subr.mxu0 0.0
    %322 = vmatpush1.msra.mxu0 %v302
    %323 = vmatprep.subr.mxu0 0.0
    %324 = vmatpush1.msra.mxu0 0.0
    %325 = vmatprep.subr.mxu0 0.0
    %326 = vmatpush1.msra.mxu0 0.0
    %327 = vmatprep.subr.mxu0 0.0
    %328 = vmatpush1.msra.mxu0 0.0
    %329 = vmatprep.subr.mxu0 0.0
    %330 = vmatpush1.msra.mxu0 0.0
    %331 = vmatprep.subr.mxu0 0.0
    %332 = vmatpush1.msra.mxu0 0.0
    %333 = vmatprep.subr.mxu0 0.0
    %334 = vmatpush1.msra.mxu0 0.0
    %335 = vmatprep.subr.mxu0 0.0
    %336 = vmatpush1.msra.mxu0 0.0
    %337 = vmatprep.subr.mxu0 0.0
    %338 = vmatpush1.msra.mxu0 0.0
    %339 = vmatprep.subr.mxu0 0.0
    %340 = vmatpush1.msra.mxu0 0.0
    %341 = vmatprep.subr.mxu0 0.0
    %342 = vmatpush1.msra.mxu0 0.0
    %343 = vmatprep.subr.mxu0 0.0
    %344 = vmatpush1.msra.mxu0 0.0
    %345 = vmatprep.subr.mxu0 0.0
    %346 = vmatpush1.msra.mxu0 0.0
    %347 = vmatprep.subr.mxu0 0.0
    %348 = vmatpush1.msra.mxu0 0.0
    %349 = vmatprep.subr.mxu0 0.0
    %350 = vmatpush1.msra.mxu0 0.0
    %351 = vmatprep.subr.mxu0 0.0
    %352 = vmatpush1.msra.mxu0 0.0
    %353 = vmatprep.subr.mxu0 0.0
    %354 = vmatpush1.msra.mxu0 0.0
    %355 = vmatprep.subr.mxu0 0.0
    %356 = vmatpush1.msra.mxu0 0.0
    %357 = vmatprep.subr.mxu0 0.0
    %358 = vmatpush1.msra.mxu0 0.0
    %359 = vmatprep.subr.mxu0 0.0
    %360 = vmatpush1.msra.mxu0 0.0
    %361 = vmatprep.subr.mxu0 0.0
    %362 = vmatpush1.msra.mxu0 0.0
    %363 = vmatprep.subr.mxu0 0.0
    %364 = vmatpush1.msra.mxu0 0.0
    %365 = vmatprep.subr.mxu0 0.0
    %366 = vmatpush1.msra.mxu0 0.0
    %367 = vmatprep.subr.mxu0 0.0
    %368 = vmatpush1.msra.mxu0 0.0
    %369 = vmatprep.subr.mxu0 0.0
    %370 = vmatpush1.msra.mxu0 0.0
    %371 = vmatprep.subr.mxu0 0.0
    %372 = vmatpush1.msra.mxu0 0.0
    %373 = vmatprep.subr.mxu0 0.0
    %374 = vmatpush1.msra.mxu0 0.0
    %375 = vmatprep.subr.mxu0 0.0
    %376 = vmatpush1.msra.mxu0 0.0
    %377 = vmatprep.subr.mxu0 0.0
    %378 = vmatpush1.msra.mxu0 0.0
    %379 = vmatprep.mubr.f32.mxu0 0.0
    %380 = vmatmul.mubr.f32.gmra.mrb[0].mxu0 %v304
    %v381 = vpop.f32.mrb[0].mxu0
    %v382 = vadd.f32 0.0, %v381
    %v383 = vpop.f32.mrb[0].mxu0
    %384 = vmatprep.mubr.f32.mxu0 0.0
    %385 = vmatmul.mubr.f32.gmra.mrb[0].mxu0 %v307
    %v386 = vpop.f32.mrb[0].mxu0
    %v387 = vadd.f32 0.0, %v386
    %v388 = vpop.f32.mrb[0].mxu0
    %389 = vmatprep.mubr.f32.mxu0 0.0
    %390 = vmatmul.mubr.f32.gmra.mrb[0].mxu0 %v310
    %v391 = vpop.f32.mrb[0].mxu0
    %v392 = vadd.f32 0.0, %v391
    %v393 = vpop.f32.mrb[0].mxu0
    %394 = vmatprep.mubr.f32.mxu0 0.0
    %395 = vmatmul.mubr.f32.gmra.mrb[0].mxu0 %v313
    %v396 = vpop.f32.mrb[0].mxu0
    %v397 = vadd.f32 0.0, %v396
    %v398 = vpop.f32.mrb[0].mxu0
    %399 = vdwg.mxu0
    %v400 = vadd.f32 %v276, %v382
    %v401 = vadd.f32 %v281, %v387
    %v402 = vadd.f32 %v286, %v392
    %v403 = vadd.f32 %v291, %v397
    %v404 = vld [vmem:[#allocation2 + $0x3] sm:$0xff]
    %v405 = vld [vmem:[#allocation2 + $0xb] sm:$0xff]
    %v406 = vld [vmem:[#allocation2 + $0x1b] sm:$0xff]
    %v407 = vld [vmem:[#allocation2 + $0x23] sm:$0xff]
    %s408 = scalar_lea.vmem [#allocation6], 96
    %v409 = vld [vmem:[%s408] sm:$0xff]
    %v410 = vld [vmem:[%s408 + $0x8] sm:$0xff]
    %v411 = vld [vmem:[%s408 + $0x10] sm:$0xff]
    %v412 = vld [vmem:[%s408 + $0x18] sm:$0xff]
    %v414 = vsel %vm78, %v404, 0
    %v417 = vsel %vm78, %v405, 0
    %v420 = vsel %vm78, %v406, 0
    %v423 = vsel %vm78, %v407, 0
    %425 = vmatprep.subr.mxu0 0.0
    %426 = vmatpush1.msra.mxu0 %v409
    %427 = vmatprep.subr.mxu0 0.0
    %428 = vmatpush1.msra.mxu0 %v410
    %429 = vmatprep.subr.mxu0 0.0
    %430 = vmatpush1.msra.mxu0 %v411
    %431 = vmatprep.subr.mxu0 0.0
    %432 = vmatpush1.msra.mxu0 %v412
    %433 = vmatprep.subr.mxu0 0.0
    %434 = vmatpush1.msra.mxu0 0.0
    %435 = vmatprep.subr.mxu0 0.0
    %436 = vmatpush1.msra.mxu0 0.0
    %437 = vmatprep.subr.mxu0 0.0
    %438 = vmatpush1.msra.mxu0 0.0
    %439 = vmatprep.subr.mxu0 0.0
    %440 = vmatpush1.msra.mxu0 0.0
    %441 = vmatprep.subr.mxu0 0.0
    %442 = vmatpush1.msra.mxu0 0.0
    %443 = vmatprep.subr.mxu0 0.0
    %444 = vmatpush1.msra.mxu0 0.0
    %445 = vmatprep.subr.mxu0 0.0
    %446 = vmatpush1.msra.mxu0 0.0
    %447 = vmatprep.subr.mxu0 0.0
    %448 = vmatpush1.msra.mxu0 0.0
    %449 = vmatprep.subr.mxu0 0.0
    %450 = vmatpush1.msra.mxu0 0.0
    %451 = vmatprep.subr.mxu0 0.0
    %452 = vmatpush1.msra.mxu0 0.0
    %453 = vmatprep.subr.mxu0 0.0
    %454 = vmatpush1.msra.mxu0 0.0
    %455 = vmatprep.subr.mxu0 0.0
    %456 = vmatpush1.msra.mxu0 0.0
    %457 = vmatprep.subr.mxu0 0.0
    %458 = vmatpush1.msra.mxu0 0.0
    %459 = vmatprep.subr.mxu0 0.0
    %460 = vmatpush1.msra.mxu0 0.0
    %461 = vmatprep.subr.mxu0 0.0
    %462 = vmatpush1.msra.mxu0 0.0
    %463 = vmatprep.subr.mxu0 0.0
    %464 = vmatpush1.msra.mxu0 0.0
    %465 = vmatprep.subr.mxu0 0.0
    %466 = vmatpush1.msra.mxu0 0.0
    %467 = vmatprep.subr.mxu0 0.0
    %468 = vmatpush1.msra.mxu0 0.0
    %469 = vmatprep.subr.mxu0 0.0
    %470 = vmatpush1.msra.mxu0 0.0
    %471 = vmatprep.subr.mxu0 0.0
    %472 = vmatpush1.msra.mxu0 0.0
    %473 = vmatprep.subr.mxu0 0.0
    %474 = vmatpush1.msra.mxu0 0.0
    %475 = vmatprep.subr.mxu0 0.0
    %476 = vmatpush1.msra.mxu0 0.0
    %477 = vmatprep.subr.mxu0 0.0
    %478 = vmatpush1.msra.mxu0 0.0
    %479 = vmatprep.subr.mxu0 0.0
    %480 = vmatpush1.msra.mxu0 0.0
    %481 = vmatprep.subr.mxu0 0.0
    %482 = vmatpush1.msra.mxu0 0.0
    %483 = vmatprep.subr.mxu0 0.0
    %484 = vmatpush1.msra.mxu0 0.0
    %485 = vmatprep.subr.mxu0 0.0
    %486 = vmatpush1.msra.mxu0 0.0
    %487 = vmatprep.subr.mxu0 0.0
    %488 = vmatpush1.msra.mxu0 0.0
    %489 = vmatprep.mubr.f32.mxu0 0.0
    %490 = vmatmul.mubr.f32.gmra.mrb[0].mxu0 %v414
    %v491 = vpop.f32.mrb[0].mxu0
    %v492 = vadd.f32 0.0, %v491
    %v493 = vpop.f32.mrb[0].mxu0
    %494 = vmatprep.mubr.f32.mxu0 0.0
    %495 = vmatmul.mubr.f32.gmra.mrb[0].mxu0 %v417
    %v496 = vpop.f32.mrb[0].mxu0
    %v497 = vadd.f32 0.0, %v496
    %v498 = vpop.f32.mrb[0].mxu0
    %499 = vmatprep.mubr.f32.mxu0 0.0
    %500 = vmatmul.mubr.f32.gmra.mrb[0].mxu0 %v420
    %v501 = vpop.f32.mrb[0].mxu0
    %v502 = vadd.f32 0.0, %v501
    %v503 = vpop.f32.mrb[0].mxu0
    %504 = vmatprep.mubr.f32.mxu0 0.0
    %505 = vmatmul.mubr.f32.gmra.mrb[0].mxu0 %v423
    %v506 = vpop.f32.mrb[0].mxu0
    %v507 = vadd.f32 0.0, %v506
    %v508 = vpop.f32.mrb[0].mxu0
    %509 = vdwg.mxu0
    %v510 = vadd.f32 %v400, %v492
    %v511 = vadd.f32 %v401, %v497
    %v512 = vadd.f32 %v402, %v502
    %v513 = vadd.f32 %v403, %v507
    %v514 = vld [vmem:[#allocation2 + $0x4] sm:$0xff]
    %v515 = vld [vmem:[#allocation2 + $0xc] sm:$0xff]
    %v516 = vld [vmem:[#allocation2 + $0x1c] sm:$0xff]
    %v517 = vld [vmem:[#allocation2 + $0x24] sm:$0xff]
    %s518 = scalar_lea.vmem [#allocation6], 128
    %v519 = vld [vmem:[%s518] sm:$0xff]
    %v520 = vld [vmem:[%s518 + $0x8] sm:$0xff]
    %v521 = vld [vmem:[%s518 + $0x10] sm:$0xff]
    %v522 = vld [vmem:[%s518 + $0x18] sm:$0xff]
    %v524 = vsel %vm78, %v514, 0
    %v527 = vsel %vm78, %v515, 0
    %v530 = vsel %vm78, %v516, 0
    %v533 = vsel %vm78, %v517, 0
    %535 = vmatprep.subr.mxu0 0.0
    %536 = vmatpush1.msra.mxu0 %v519
    %537 = vmatprep.subr.mxu0 0.0
    %538 = vmatpush1.msra.mxu0 %v520
    %539 = vmatprep.subr.mxu0 0.0
    %540 = vmatpush1.msra.mxu0 %v521
    %541 = vmatprep.subr.mxu0 0.0
    %542 = vmatpush1.msra.mxu0 %v522
    %543 = vmatprep.subr.mxu0 0.0
    %544 = vmatpush1.msra.mxu0 0.0
    %545 = vmatprep.subr.mxu0 0.0
    %546 = vmatpush1.msra.mxu0 0.0
    %547 = vmatprep.subr.mxu0 0.0
    %548 = vmatpush1.msra.mxu0 0.0
    %549 = vmatprep.subr.mxu0 0.0
    %550 = vmatpush1.msra.mxu0 0.0
    %551 = vmatprep.subr.mxu0 0.0
    %552 = vmatpush1.msra.mxu0 0.0
    %553 = vmatprep.subr.mxu0 0.0
    %554 = vmatpush1.msra.mxu0 0.0
    %555 = vmatprep.subr.mxu0 0.0
    %556 = vmatpush1.msra.mxu0 0.0
    %557 = vmatprep.subr.mxu0 0.0
    %558 = vmatpush1.msra.mxu0 0.0
    %559 = vmatprep.subr.mxu0 0.0
    %560 = vmatpush1.msra.mxu0 0.0
    %561 = vmatprep.subr.mxu0 0.0
    %562 = vmatpush1.msra.mxu0 0.0
    %563 = vmatprep.subr.mxu0 0.0
    %564 = vmatpush1.msra.mxu0 0.0
    %565 = vmatprep.subr.mxu0 0.0
    %566 = vmatpush1.msra.mxu0 0.0
    %567 = vmatprep.subr.mxu0 0.0
    %568 = vmatpush1.msra.mxu0 0.0
    %569 = vmatprep.subr.mxu0 0.0
    %570 = vmatpush1.msra.mxu0 0.0
    %571 = vmatprep.subr.mxu0 0.0
    %572 = vmatpush1.msra.mxu0 0.0
    %573 = vmatprep.subr.mxu0 0.0
    %574 = vmatpush1.msra.mxu0 0.0
    %575 = vmatprep.subr.mxu0 0.0
    %576 = vmatpush1.msra.mxu0 0.0
    %577 = vmatprep.subr.mxu0 0.0
    %578 = vmatpush1.msra.mxu0 0.0
    %579 = vmatprep.subr.mxu0 0.0
    %580 = vmatpush1.msra.mxu0 0.0
    %581 = vmatprep.subr.mxu0 0.0
    %582 = vmatpush1.msra.mxu0 0.0
    %583 = vmatprep.subr.mxu0 0.0
    %584 = vmatpush1.msra.mxu0 0.0
    %585 = vmatprep.subr.mxu0 0.0
    %586 = vmatpush1.msra.mxu0 0.0
    %587 = vmatprep.subr.mxu0 0.0
    %588 = vmatpush1.msra.mxu0 0.0
    %589 = vmatprep.subr.mxu0 0.0
    %590 = vmatpush1.msra.mxu0 0.0
    %591 = vmatprep.subr.mxu0 0.0
    %592 = vmatpush1.msra.mxu0 0.0
    %593 = vmatprep.subr.mxu0 0.0
    %594 = vmatpush1.msra.mxu0 0.0
    %595 = vmatprep.subr.mxu0 0.0
    %596 = vmatpush1.msra.mxu0 0.0
    %597 = vmatprep.subr.mxu0 0.0
    %598 = vmatpush1.msra.mxu0 0.0
    %599 = vmatprep.mubr.f32.mxu0 0.0
    %600 = vmatmul.mubr.f32.gmra.mrb[0].mxu0 %v524
    %v601 = vpop.f32.mrb[0].mxu0
    %v602 = vadd.f32 0.0, %v601
    %v603 = vpop.f32.mrb[0].mxu0
    %604 = vmatprep.mubr.f32.mxu0 0.0
    %605 = vmatmul.mubr.f32.gmra.mrb[0].mxu0 %v527
    %v606 = vpop.f32.mrb[0].mxu0
    %v607 = vadd.f32 0.0, %v606
    %v608 = vpop.f32.mrb[0].mxu0
    %609 = vmatprep.mubr.f32.mxu0 0.0
    %610 = vmatmul.mubr.f32.gmra.mrb[0].mxu0 %v530
    %v611 = vpop.f32.mrb[0].mxu0
    %v612 = vadd.f32 0.0, %v611
    %v613 = vpop.f32.mrb[0].mxu0
    %614 = vmatprep.mubr.f32.mxu0 0.0
    %615 = vmatmul.mubr.f32.gmra.mrb[0].mxu0 %v533
    %v616 = vpop.f32.mrb[0].mxu0
    %v617 = vadd.f32 0.0, %v616
    %v618 = vpop.f32.mrb[0].mxu0
    %619 = vdwg.mxu0
    %v620 = vadd.f32 %v510, %v602
    %v621 = vadd.f32 %v511, %v607
    %v622 = vadd.f32 %v512, %v612
    %v623 = vadd.f32 %v513, %v617
    %v624 = vld [vmem:[%s2] sm:$0x1]
    %v626 = vlaneseq
    %v627 = vshrl.u32 %v626, 7
    %v628 = vsub.s32 0, %v627
    %v629 = vrot.slane %v624, %v628
    %v631 = vadd.f32 %v620, %v629
    %v632 = vadd.f32 %v621, %v629
    %v633 = vadd.f32 %v622, %v629
    %v634 = vadd.f32 %v623, %v629
    %v635 = vmul.f32 %v631, 0.5
    %v636 = vmul.f32 %v632, 0.5
    %v637 = vmul.f32 %v633, 0.5
    %v638 = vmul.f32 %v634, 0.5
    %v639 = vmul.f32 %v631, 0.70710677
    %v640 = vmul.f32 %v632, 0.70710677
    %v641 = vmul.f32 %v633, 0.70710677
    %v642 = vmul.f32 %v634, 0.70710677
    %v643 = verf.f32.pop %v639
    %v644 = verf.f32.pop %v640
    %v645 = verf.f32.pop %v641
    %v646 = verf.f32.pop %v642
    %v647 = vadd.f32 %v643, 1.0
    %v648 = vadd.f32 %v644, 1.0
    %v649 = vadd.f32 %v645, 1.0
    %v650 = vadd.f32 %v646, 1.0
    %v651 = vmul.f32 %v635, %v647
    %v652 = vmul.f32 %v636, %v648
    %v653 = vmul.f32 %v637, %v649
    %v654 = vmul.f32 %v638, %v650
    %v655 = vsel %vm78, %v651, 0.0
    %v656 = vsel %vm78, %v652, 0.0
    %v657 = vadd.f32 %v655, %v656
    %v658 = vrot.slane %v657, 4
    %v659 = vadd.f32 %v657, %v658
    %v660 = vrot.slane %v659, 2
    %v661 = vadd.f32 %v659, %v660
    %v662 = vrot.slane %v661, 1
    %v663 = vadd.f32 %v661, %v662
    %v664 = vsel %vm78, %v653, 0.0
    %v665 = vsel %vm78, %v654, 0.0
    %v666 = vadd.f32 %v664, %v665
    %v667 = vrot.slane %v666, 4
    %v668 = vadd.f32 %v666, %v667
    %v669 = vrot.slane %v668, 2
    %v670 = vadd.f32 %v668, %v669
    %v671 = vrot.slane %v670, 1
    %v672 = vadd.f32 %v670, %v671
    %v673 = vrcp.pop 16.0
    %v674 = vmul.f32 %v663, %v673
    %v675 = vmul.f32 %v672, %v673
    %v676 = vsub.f32 %v651, %v674
    %v677 = vsub.f32 %v652, %v674
    %v678 = vsub.f32 %v653, %v675
    %v679 = vsub.f32 %v654, %v675
    %v680 = vmul.f32 %v676, %v676
    %v681 = vmul.f32 %v677, %v677
    %v682 = vmul.f32 %v678, %v678
    %v683 = vmul.f32 %v679, %v679
    %v684 = vsel %vm78, %v680, 0.0
    %v685 = vsel %vm78, %v681, 0.0
    %v686 = vadd.f32 %v684, %v685
    %v687 = vrot.slane %v686, 4
    %v688 = vadd.f32 %v686, %v687
    %v689 = vrot.slane %v688, 2
    %v690 = vadd.f32 %v688, %v689
    %v691 = vrot.slane %v690, 1
    %v692 = vadd.f32 %v690, %v691
    %v693 = vsel %vm78, %v682, 0.0
    %v694 = vsel %vm78, %v683, 0.0
    %v695 = vadd.f32 %v693, %v694
    %v696 = vrot.slane %v695, 4
    %v697 = vadd.f32 %v695, %v696
    %v698 = vrot.slane %v697, 2
    %v699 = vadd.f32 %v697, %v698
    %v700 = vrot.slane %v699, 1
    %v701 = vadd.f32 %v699, %v700
    %v702 = vmul.f32 %v692, %v673
    %v703 = vmul.f32 %v701, %v673
    %v704 = vadd.f32 %v702, 1e-05
    %v705 = vadd.f32 %v703, 1e-05
    %v706 = vrsqrt.pop %v704
    %v707 = vrsqrt.pop %v705
    %v708 = vmul.f32 %v676, %v706
    %v709 = vmul.f32 %v677, %v706
    %v710 = vmul.f32 %v678, %v707
    %v711 = vmul.f32 %v679, %v707
    %v712 = vld [vmem:[%s3] sm:$0x1]
    %v714 = vlaneseq
    %v715 = vshrl.u32 %v714, 7
    %v716 = vsub.s32 0, %v715
    %v717 = vrot.slane %v712, %v716
    %v719 = vmul.f32 %v708, %v717
    %v720 = vmul.f32 %v709, %v717
    %v721 = vmul.f32 %v710, %v717
    %v722 = vmul.f32 %v711, %v717
    %v723 = vld [vmem:[%s4] sm:$0x1]
    %v725 = vlaneseq
    %v726 = vshrl.u32 %v725, 7
    %v727 = vsub.s32 0, %v726
    %v728 = vrot.slane %v723, %v727
    %v730 = vadd.f32 %v719, %v728
    %v731 = vadd.f32 %v720, %v728
    %v732 = vadd.f32 %v721, %v728
    %v733 = vadd.f32 %v722, %v728
    %734 = vst.msk [vmem:[#allocation2 + $0x2] sm:$0xff] %vm78, %v730
    %735 = vst.msk [vmem:[#allocation2 + $0xa] sm:$0xff] %vm78, %v731
    %736 = vst.msk [vmem:[#allocation2 + $0x1a] sm:$0xff] %vm78, %v732
    %737 = vst.msk [vmem:[#allocation2 + $0x22] sm:$0xff] %vm78, %v733
    %v738 = vld [vmem:[#allocation2] sm:$0xff]
    %v739 = vld [vmem:[#allocation2 + $0x8] sm:$0xff]
    %v740 = vld [vmem:[#allocation2 + $0x18] sm:$0xff]
    %v741 = vld [vmem:[#allocation2 + $0x20] sm:$0xff]
    %v742 = vld [vmem:[#allocation8] sm:$0xff]
    %v743 = vld [vmem:[#allocation8 + $0x8] sm:$0xff]
    %v744 = vld [vmem:[#allocation8 + $0x10] sm:$0xff]
    %v745 = vld [vmem:[#allocation8 + $0x18] sm:$0xff]
    %v746 = vld [vmem:[#allocation2 + $0x1] sm:$0xff]
    %v747 = vld [vmem:[#allocation2 + $0x9] sm:$0xff]
    %v748 = vld [vmem:[#allocation2 + $0x19] sm:$0xff]
    %v749 = vld [vmem:[#allocation2 + $0x21] sm:$0xff]
    %s750 = scalar_lea.vmem [#allocation8], 32
    %v751 = vld [vmem:[%s750] sm:$0xff]
    %v752 = vld [vmem:[%s750 + $0x8] sm:$0xff]
    %v753 = vld [vmem:[%s750 + $0x10] sm:$0xff]
    %v754 = vld [vmem:[%s750 + $0x18] sm:$0xff]
    %v756 = vsel %vm78, %v746, 0
    %v759 = vsel %vm78, %v747, 0
    %v762 = vsel %vm78, %v748, 0
    %v765 = vsel %vm78, %v749, 0
    %767 = vmatprep.subr.mxu0 0.0
    %768 = vmatpush1.msra.mxu0 %v751
    %769 = vmatprep.subr.mxu0 0.0
    %770 = vmatpush1.msra.mxu0 %v752
    %771 = vmatprep.subr.mxu0 0.0
    %772 = vmatpush1.msra.mxu0 %v753
    %773 = vmatprep.subr.mxu0 0.0
    %774 = vmatpush1.msra.mxu0 %v754
    %775 = vmatprep.subr.mxu0 0.0
    %776 = vmatpush1.msra.mxu0 0.0
    %777 = vmatprep.subr.mxu0 0.0
    %778 = vmatpush1.msra.mxu0 0.0
    %779 = vmatprep.subr.mxu0 0.0
    %780 = vmatpush1.msra.mxu0 0.0
    %781 = vmatprep.subr.mxu0 0.0
    %782 = vmatpush1.msra.mxu0 0.0
    %783 = vmatprep.subr.mxu0 0.0
    %784 = vmatpush1.msra.mxu0 0.0
    %785 = vmatprep.subr.mxu0 0.0
    %786 = vmatpush1.msra.mxu0 0.0
    %787 = vmatprep.subr.mxu0 0.0
    %788 = vmatpush1.msra.mxu0 0.0
    %789 = vmatprep.subr.mxu0 0.0
    %790 = vmatpush1.msra.mxu0 0.0
    %791 = vmatprep.subr.mxu0 0.0
    %792 = vmatpush1.msra.mxu0 0.0
    %793 = vmatprep.subr.mxu0 0.0
    %794 = vmatpush1.msra.mxu0 0.0
    %795 = vmatprep.subr.mxu0 0.0
    %796 = vmatpush1.msra.mxu0 0.0
    %797 = vmatprep.subr.mxu0 0.0
    %798 = vmatpush1.msra.mxu0 0.0
    %799 = vmatprep.subr.mxu0 0.0
    %800 = vmatpush1.msra.mxu0 0.0
    %801 = vmatprep.subr.mxu0 0.0
    %802 = vmatpush1.msra.mxu0 0.0
    %803 = vmatprep.subr.mxu0 0.0
    %804 = vmatpush1.msra.mxu0 0.0
    %805 = vmatprep.subr.mxu0 0.0
    %806 = vmatpush1.msra.mxu0 0.0
    %807 = vmatprep.subr.mxu0 0.0
    %808 = vmatpush1.msra.mxu0 0.0
    %809 = vmatprep.subr.mxu0 0.0
    %810 = vmatpush1.msra.mxu0 0.0
    %811 = vmatprep.subr.mxu0 0.0
    %812 = vmatpush1.msra.mxu0 0.0
    %813 = vmatprep.subr.mxu0 0.0
    %814 = vmatpush1.msra.mxu0 0.0
    %815 = vmatprep.subr.mxu0 0.0
    %816 = vmatpush1.msra.mxu0 0.0
    %817 = vmatprep.subr.mxu0 0.0
    %818 = vmatpush1.msra.mxu0 0.0
    %819 = vmatprep.subr.mxu0 0.0
    %820 = vmatpush1.msra.mxu0 0.0
    %821 = vmatprep.subr.mxu0 0.0
    %822 = vmatpush1.msra.mxu0 0.0
    %823 = vmatprep.subr.mxu0 0.0
    %824 = vmatpush1.msra.mxu0 0.0
    %825 = vmatprep.subr.mxu0 0.0
    %826 = vmatpush1.msra.mxu0 0.0
    %827 = vmatprep.subr.mxu0 0.0
    %828 = vmatpush1.msra.mxu0 0.0
    %829 = vmatprep.subr.mxu0 0.0
    %830 = vmatpush1.msra.mxu0 0.0
    %831 = vmatprep.mubr.f32.mxu0 0.0
    %832 = vmatmul.mubr.f32.gmra.mrb[0].mxu0 %v756
    %v833 = vpop.f32.mrb[0].mxu0
    %v834 = vadd.f32 0.0, %v833
    %v835 = vpop.f32.mrb[0].mxu0
    %836 = vmatprep.mubr.f32.mxu0 0.0
    %837 = vmatmul.mubr.f32.gmra.mrb[0].mxu0 %v759
    %v838 = vpop.f32.mrb[0].mxu0
    %v839 = vadd.f32 0.0, %v838
    %v840 = vpop.f32.mrb[0].mxu0
    %841 = vmatprep.mubr.f32.mxu0 0.0
    %842 = vmatmul.mubr.f32.gmra.mrb[0].mxu0 %v762
    %v843 = vpop.f32.mrb[0].mxu0
    %v844 = vadd.f32 0.0, %v843
    %v845 = vpop.f32.mrb[0].mxu0
    %846 = vmatprep.mubr.f32.mxu0 0.0
    %847 = vmatmul.mubr.f32.gmra.mrb[0].mxu0 %v765
    %v848 = vpop.f32.mrb[0].mxu0
    %v849 = vadd.f32 0.0, %v848
    %v850 = vpop.f32.mrb[0].mxu0
    %851 = vdwg.mxu0
    %v853 = vsel %vm78, %v738, 0
    %v856 = vsel %vm78, %v739, 0
    %v859 = vsel %vm78, %v740, 0
    %v862 = vsel %vm78, %v741, 0
    %864 = vmatprep.subr.mxu0 0.0
    %865 = vmatpush1.msra.mxu0 %v742
    %866 = vmatprep.subr.mxu0 0.0
    %867 = vmatpush1.msra.mxu0 %v743
    %868 = vmatprep.subr.mxu0 0.0
    %869 = vmatpush1.msra.mxu0 %v744
    %870 = vmatprep.subr.mxu0 0.0
    %871 = vmatpush1.msra.mxu0 %v745
    %872 = vmatprep.subr.mxu0 0.0
    %873 = vmatpush1.msra.mxu0 0.0
    %874 = vmatprep.subr.mxu0 0.0
    %875 = vmatpush1.msra.mxu0 0.0
    %876 = vmatprep.subr.mxu0 0.0
    %877 = vmatpush1.msra.mxu0 0.0
    %878 = vmatprep.subr.mxu0 0.0
    %879 = vmatpush1.msra.mxu0 0.0
    %880 = vmatprep.subr.mxu0 0.0
    %881 = vmatpush1.msra.mxu0 0.0
    %882 = vmatprep.subr.mxu0 0.0
    %883 = vmatpush1.msra.mxu0 0.0
    %884 = vmatprep.subr.mxu0 0.0
    %885 = vmatpush1.msra.mxu0 0.0
    %886 = vmatprep.subr.mxu0 0.0
    %887 = vmatpush1.msra.mxu0 0.0
    %888 = vmatprep.subr.mxu0 0.0
    %889 = vmatpush1.msra.mxu0 0.0
    %890 = vmatprep.subr.mxu0 0.0
    %891 = vmatpush1.msra.mxu0 0.0
    %892 = vmatprep.subr.mxu0 0.0
    %893 = vmatpush1.msra.mxu0 0.0
    %894 = vmatprep.subr.mxu0 0.0
    %895 = vmatpush1.msra.mxu0 0.0
    %896 = vmatprep.subr.mxu0 0.0
    %897 = vmatpush1.msra.mxu0 0.0
    %898 = vmatprep.subr.mxu0 0.0
    %899 = vmatpush1.msra.mxu0 0.0
    %900 = vmatprep.subr.mxu0 0.0
    %901 = vmatpush1.msra.mxu0 0.0
    %902 = vmatprep.subr.mxu0 0.0
    %903 = vmatpush1.msra.mxu0 0.0
    %904 = vmatprep.subr.mxu0 0.0
    %905 = vmatpush1.msra.mxu0 0.0
    %906 = vmatprep.subr.mxu0 0.0
    %907 = vmatpush1.msra.mxu0 0.0
    %908 = vmatprep.subr.mxu0 0.0
    %909 = vmatpush1.msra.mxu0 0.0
    %910 = vmatprep.subr.mxu0 0.0
    %911 = vmatpush1.msra.mxu0 0.0
    %912 = vmatprep.subr.mxu0 0.0
    %913 = vmatpush1.msra.mxu0 0.0
    %914 = vmatprep.subr.mxu0 0.0
    %915 = vmatpush1.msra.mxu0 0.0
    %916 = vmatprep.subr.mxu0 0.0
    %917 = vmatpush1.msra.mxu0 0.0
    %918 = vmatprep.subr.mxu0 0.0
    %919 = vmatpush1.msra.mxu0 0.0
    %920 = vmatprep.subr.mxu0 0.0
    %921 = vmatpush1.msra.mxu0 0.0
    %922 = vmatprep.subr.mxu0 0.0
    %923 = vmatpush1.msra.mxu0 0.0
    %924 = vmatprep.subr.mxu0 0.0
    %925 = vmatpush1.msra.mxu0 0.0
    %926 = vmatprep.subr.mxu0 0.0
    %927 = vmatpush1.msra.mxu0 0.0
    %928 = vmatprep.mubr.f32.mxu0 0.0
    %929 = vmatmul.mubr.f32.gmra.mrb[0].mxu0 %v853
    %v930 = vpop.f32.mrb[0].mxu0
    %v931 = vadd.f32 %v834, %v930
    %v932 = vpop.f32.mrb[0].mxu0
    %933 = vmatprep.mubr.f32.mxu0 0.0
    %934 = vmatmul.mubr.f32.gmra.mrb[0].mxu0 %v856
    %v935 = vpop.f32.mrb[0].mxu0
    %v936 = vadd.f32 %v839, %v935
    %v937 = vpop.f32.mrb[0].mxu0
    %938 = vmatprep.mubr.f32.mxu0 0.0
    %939 = vmatmul.mubr.f32.gmra.mrb[0].mxu0 %v859
    %v940 = vpop.f32.mrb[0].mxu0
    %v941 = vadd.f32 %v844, %v940
    %v942 = vpop.f32.mrb[0].mxu0
    %943 = vmatprep.mubr.f32.mxu0 0.0
    %944 = vmatmul.mubr.f32.gmra.mrb[0].mxu0 %v862
    %v945 = vpop.f32.mrb[0].mxu0
    %v946 = vadd.f32 %v849, %v945
    %v947 = vpop.f32.mrb[0].mxu0
    %948 = vdwg.mxu0
    %v949 = vld [vmem:[#allocation2 + $0x2] sm:$0xff]
    %v950 = vld [vmem:[#allocation2 + $0xa] sm:$0xff]
    %v951 = vld [vmem:[#allocation2 + $0x1a] sm:$0xff]
    %v952 = vld [vmem:[#allocation2 + $0x22] sm:$0xff]
    %s953 = scalar_lea.vmem [#allocation8], 64
    %v954 = vld [vmem:[%s953] sm:$0xff]
    %v955 = vld [vmem:[%s953 + $0x8] sm:$0xff]
    %v956 = vld [vmem:[%s953 + $0x10] sm:$0xff]
    %v957 = vld [vmem:[%s953 + $0x18] sm:$0xff]
    %v959 = vsel %vm78, %v949, 0
    %v962 = vsel %vm78, %v950, 0
    %v965 = vsel %vm78, %v951, 0
    %v968 = vsel %vm78, %v952, 0
    %970 = vmatprep.subr.mxu0 0.0
    %971 = vmatpush1.msra.mxu0 %v954
    %972 = vmatprep.subr.mxu0 0.0
    %973 = vmatpush1.msra.mxu0 %v955
    %974 = vmatprep.subr.mxu0 0.0
    %975 = vmatpush1.msra.mxu0 %v956
    %976 = vmatprep.subr.mxu0 0.0
    %977 = vmatpush1.msra.mxu0 %v957
    %978 = vmatprep.subr.mxu0 0.0
    %979 = vmatpush1.msra.mxu0 0.0
    %980 = vmatprep.subr.mxu0 0.0
    %981 = vmatpush1.msra.mxu0 0.0
    %982 = vmatprep.subr.mxu0 0.0
    %983 = vmatpush1.msra.mxu0 0.0
    %984 = vmatprep.subr.mxu0 0.0
    %985 = vmatpush1.msra.mxu0 0.0
    %986 = vmatprep.subr.mxu0 0.0
    %987 = vmatpush1.msra.mxu0 0.0
    %988 = vmatprep.subr.mxu0 0.0
    %989 = vmatpush1.msra.mxu0 0.0
    %990 = vmatprep.subr.mxu0 0.0
    %991 = vmatpush1.msra.mxu0 0.0
    %992 = vmatprep.subr.mxu0 0.0
    %993 = vmatpush1.msra.mxu0 0.0
    %994 = vmatprep.subr.mxu0 0.0
    %995 = vmatpush1.msra.mxu0 0.0
    %996 = vmatprep.subr.mxu0 0.0
    %997 = vmatpush1.msra.mxu0 0.0
    %998 = vmatprep.subr.mxu0 0.0
    %999 = vmatpush1.msra.mxu0 0.0
    %1000 = vmatprep.subr.mxu0 0.0
    %1001 = vmatpush1.msra.mxu0 0.0
    %1002 = vmatprep.subr.mxu0 0.0
    %1003 = vmatpush1.msra.mxu0 0.0
    %1004 = vmatprep.subr.mxu0 0.0
    %1005 = vmatpush1.msra.mxu0 0.0
    %1006 = vmatprep.subr.mxu0 0.0
    %1007 = vmatpush1.msra.mxu0 0.0
    %1008 = vmatprep.subr.mxu0 0.0
    %1009 = vmatpush1.msra.mxu0 0.0
    %1010 = vmatprep.subr.mxu0 0.0
    %1011 = vmatpush1.msra.mxu0 0.0
    %1012 = vmatprep.subr.mxu0 0.0
    %1013 = vmatpush1.msra.mxu0 0.0
    %1014 = vmatprep.subr.mxu0 0.0
    %1015 = vmatpush1.msra.mxu0 0.0
    %1016 = vmatprep.subr.mxu0 0.0
    %1017 = vmatpush1.msra.mxu0 0.0
    %1018 = vmatprep.subr.mxu0 0.0
    %1019 = vmatpush1.msra.mxu0 0.0
    %1020 = vmatprep.subr.mxu0 0.0
    %1021 = vmatpush1.msra.mxu0 0.0
    %1022 = vmatprep.subr.mxu0 0.0
    %1023 = vmatpush1.msra.mxu0 0.0
    %1024 = vmatprep.subr.mxu0 0.0
    %1025 = vmatpush1.msra.mxu0 0.0
    %1026 = vmatprep.subr.mxu0 0.0
    %1027 = vmatpush1.msra.mxu0 0.0
    %1028 = vmatprep.subr.mxu0 0.0
    %1029 = vmatpush1.msra.mxu0 0.0
    %1030 = vmatprep.subr.mxu0 0.0
    %1031 = vmatpush1.msra.mxu0 0.0
    %1032 = vmatprep.subr.mxu0 0.0
    %1033 = vmatpush1.msra.mxu0 0.0
    %1034 = vmatprep.mubr.f32.mxu0 0.0
    %1035 = vmatmul.mubr.f32.gmra.mrb[0].mxu0 %v959
    %v1036 = vpop.f32.mrb[0].mxu0
    %v1037 = vadd.f32 0.0, %v1036
    %v1038 = vpop.f32.mrb[0].mxu0
    %1039 = vmatprep.mubr.f32.mxu0 0.0
    %1040 = vmatmul.mubr.f32.gmra.mrb[0].mxu0 %v962
    %v1041 = vpop.f32.mrb[0].mxu0
    %v1042 = vadd.f32 0.0, %v1041
    %v1043 = vpop.f32.mrb[0].mxu0
    %1044 = vmatprep.mubr.f32.mxu0 0.0
    %1045 = vmatmul.mubr.f32.gmra.mrb[0].mxu0 %v965
    %v1046 = vpop.f32.mrb[0].mxu0
    %v1047 = vadd.f32 0.0, %v1046
    %v1048 = vpop.f32.mrb[0].mxu0
    %1049 = vmatprep.mubr.f32.mxu0 0.0
    %1050 = vmatmul.mubr.f32.gmra.mrb[0].mxu0 %v968
    %v1051 = vpop.f32.mrb[0].mxu0
    %v1052 = vadd.f32 0.0, %v1051
    %v1053 = vpop.f32.mrb[0].mxu0
    %1054 = vdwg.mxu0
    %v1055 = vadd.f32 %v931, %v1037
    %v1056 = vadd.f32 %v936, %v1042
    %v1057 = vadd.f32 %v941, %v1047
    %v1058 = vadd.f32 %v946, %v1052
    %v1059 = vld [vmem:[#allocation2 + $0x3] sm:$0xff]
    %v1060 = vld [vmem:[#allocation2 + $0xb] sm:$0xff]
    %v1061 = vld [vmem:[#allocation2 + $0x1b] sm:$0xff]
    %v1062 = vld [vmem:[#allocation2 + $0x23] sm:$0xff]
    %s1063 = scalar_lea.vmem [#allocation8], 96
    %v1064 = vld [vmem:[%s1063] sm:$0xff]
    %v1065 = vld [vmem:[%s1063 + $0x8] sm:$0xff]
    %v1066 = vld [vmem:[%s1063 + $0x10] sm:$0xff]
    %v1067 = vld [vmem:[%s1063 + $0x18] sm:$0xff]
    %v1069 = vsel %vm78, %v1059, 0
    %v1072 = vsel %vm78, %v1060, 0
    %v1075 = vsel %vm78, %v1061, 0
    %v1078 = vsel %vm78, %v1062, 0
    %1080 = vmatprep.subr.mxu0 0.0
    %1081 = vmatpush1.msra.mxu0 %v1064
    %1082 = vmatprep.subr.mxu0 0.0
    %1083 = vmatpush1.msra.mxu0 %v1065
    %1084 = vmatprep.subr.mxu0 0.0
    %1085 = vmatpush1.msra.mxu0 %v1066
    %1086 = vmatprep.subr.mxu0 0.0
    %1087 = vmatpush1.msra.mxu0 %v1067
    %1088 = vmatprep.subr.mxu0 0.0
    %1089 = vmatpush1.msra.mxu0 0.0
    %1090 = vmatprep.subr.mxu0 0.0
    %1091 = vmatpush1.msra.mxu0 0.0
    %1092 = vmatprep.subr.mxu0 0.0
    %1093 = vmatpush1.msra.mxu0 0.0
    %1094 = vmatprep.subr.mxu0 0.0
    %1095 = vmatpush1.msra.mxu0 0.0
    %1096 = vmatprep.subr.mxu0 0.0
    %1097 = vmatpush1.msra.mxu0 0.0
    %1098 = vmatprep.subr.mxu0 0.0
    %1099 = vmatpush1.msra.mxu0 0.0
    %1100 = vmatprep.subr.mxu0 0.0
    %1101 = vmatpush1.msra.mxu0 0.0
    %1102 = vmatprep.subr.mxu0 0.0
    %1103 = vmatpush1.msra.mxu0 0.0
    %1104 = vmatprep.subr.mxu0 0.0
    %1105 = vmatpush1.msra.mxu0 0.0
    %1106 = vmatprep.subr.mxu0 0.0
    %1107 = vmatpush1.msra.mxu0 0.0
    %1108 = vmatprep.subr.mxu0 0.0
    %1109 = vmatpush1.msra.mxu0 0.0
    %1110 = vmatprep.subr.mxu0 0.0
    %1111 = vmatpush1.msra.mxu0 0.0
    %1112 = vmatprep.subr.mxu0 0.0
    %1113 = vmatpush1.msra.mxu0 0.0
    %1114 = vmatprep.subr.mxu0 0.0
    %1115 = vmatpush1.msra.mxu0 0.0
    %1116 = vmatprep.subr.mxu0 0.0
    %1117 = vmatpush1.msra.mxu0 0.0
    %1118 = vmatprep.subr.mxu0 0.0
    %1119 = vmatpush1.msra.mxu0 0.0
    %1120 = vmatprep.subr.mxu0 0.0
    %1121 = vmatpush1.msra.mxu0 0.0
    %1122 = vmatprep.subr.mxu0 0.0
    %1123 = vmatpush1.msra.mxu0 0.0
    %1124 = vmatprep.subr.mxu0 0.0
    %1125 = vmatpush1.msra.mxu0 0.0
    %1126 = vmatprep.subr.mxu0 0.0
    %1127 = vmatpush1.msra.mxu0 0.0
    %1128 = vmatprep.subr.mxu0 0.0
    %1129 = vmatpush1.msra.mxu0 0.0
    %1130 = vmatprep.subr.mxu0 0.0
    %1131 = vmatpush1.msra.mxu0 0.0
    %1132 = vmatprep.subr.mxu0 0.0
    %1133 = vmatpush1.msra.mxu0 0.0
    %1134 = vmatprep.subr.mxu0 0.0
    %1135 = vmatpush1.msra.mxu0 0.0
    %1136 = vmatprep.subr.mxu0 0.0
    %1137 = vmatpush1.msra.mxu0 0.0
    %1138 = vmatprep.subr.mxu0 0.0
    %1139 = vmatpush1.msra.mxu0 0.0
    %1140 = vmatprep.subr.mxu0 0.0
    %1141 = vmatpush1.msra.mxu0 0.0
    %1142 = vmatprep.subr.mxu0 0.0
    %1143 = vmatpush1.msra.mxu0 0.0
    %1144 = vmatprep.mubr.f32.mxu0 0.0
    %1145 = vmatmul.mubr.f32.gmra.mrb[0].mxu0 %v1069
    %v1146 = vpop.f32.mrb[0].mxu0
    %v1147 = vadd.f32 0.0, %v1146
    %v1148 = vpop.f32.mrb[0].mxu0
    %1149 = vmatprep.mubr.f32.mxu0 0.0
    %1150 = vmatmul.mubr.f32.gmra.mrb[0].mxu0 %v1072
    %v1151 = vpop.f32.mrb[0].mxu0
    %v1152 = vadd.f32 0.0, %v1151
    %v1153 = vpop.f32.mrb[0].mxu0
    %1154 = vmatprep.mubr.f32.mxu0 0.0
    %1155 = vmatmul.mubr.f32.gmra.mrb[0].mxu0 %v1075
    %v1156 = vpop.f32.mrb[0].mxu0
    %v1157 = vadd.f32 0.0, %v1156
    %v1158 = vpop.f32.mrb[0].mxu0
    %1159 = vmatprep.mubr.f32.mxu0 0.0
    %1160 = vmatmul.mubr.f32.gmra.mrb[0].mxu0 %v1078
    %v1161 = vpop.f32.mrb[0].mxu0
    %v1162 = vadd.f32 0.0, %v1161
    %v1163 = vpop.f32.mrb[0].mxu0
    %1164 = vdwg.mxu0
    %v1165 = vadd.f32 %v1055, %v1147
    %v1166 = vadd.f32 %v1056, %v1152
    %v1167 = vadd.f32 %v1057, %v1157
    %v1168 = vadd.f32 %v1058, %v1162
    %v1169 = vld [vmem:[#allocation2 + $0x4] sm:$0xff]
    %v1170 = vld [vmem:[#allocation2 + $0xc] sm:$0xff]
    %v1171 = vld [vmem:[#allocation2 + $0x1c] sm:$0xff]
    %v1172 = vld [vmem:[#allocation2 + $0x24] sm:$0xff]
    %s1173 = scalar_lea.vmem [#allocation8], 128
    %v1174 = vld [vmem:[%s1173] sm:$0xff]
    %v1175 = vld [vmem:[%s1173 + $0x8] sm:$0xff]
    %v1176 = vld [vmem:[%s1173 + $0x10] sm:$0xff]
    %v1177 = vld [vmem:[%s1173 + $0x18] sm:$0xff]
    %v1179 = vsel %vm78, %v1169, 0
    %v1182 = vsel %vm78, %v1170, 0
    %v1185 = vsel %vm78, %v1171, 0
    %v1188 = vsel %vm78, %v1172, 0
    %1190 = vmatprep.subr.mxu0 0.0
    %1191 = vmatpush1.msra.mxu0 %v1174
    %1192 = vmatprep.subr.mxu0 0.0
    %1193 = vmatpush1.msra.mxu0 %v1175
    %1194 = vmatprep.subr.mxu0 0.0
    %1195 = vmatpush1.msra.mxu0 %v1176
    %1196 = vmatprep.subr.mxu0 0.0
    %1197 = vmatpush1.msra.mxu0 %v1177
    %1198 = vmatprep.subr.mxu0 0.0
    %1199 = vmatpush1.msra.mxu0 0.0
    %1200 = vmatprep.subr.mxu0 0.0
    %1201 = vmatpush1.msra.mxu0 0.0
    %1202 = vmatprep.subr.mxu0 0.0
    %1203 = vmatpush1.msra.mxu0 0.0
    %1204 = vmatprep.subr.mxu0 0.0
    %1205 = vmatpush1.msra.mxu0 0.0
    %1206 = vmatprep.subr.mxu0 0.0
    %1207 = vmatpush1.msra.mxu0 0.0
    %1208 = vmatprep.subr.mxu0 0.0
    %1209 = vmatpush1.msra.mxu0 0.0
    %1210 = vmatprep.subr.mxu0 0.0
    %1211 = vmatpush1.msra.mxu0 0.0
    %1212 = vmatprep.subr.mxu0 0.0
    %1213 = vmatpush1.msra.mxu0 0.0
    %1214 = vmatprep.subr.mxu0 0.0
    %1215 = vmatpush1.msra.mxu0 0.0
    %1216 = vmatprep.subr.mxu0 0.0
    %1217 = vmatpush1.msra.mxu0 0.0
    %1218 = vmatprep.subr.mxu0 0.0
    %1219 = vmatpush1.msra.mxu0 0.0
    %1220 = vmatprep.subr.mxu0 0.0
    %1221 = vmatpush1.msra.mxu0 0.0
    %1222 = vmatprep.subr.mxu0 0.0
    %1223 = vmatpush1.msra.mxu0 0.0
    %1224 = vmatprep.subr.mxu0 0.0
    %1225 = vmatpush1.msra.mxu0 0.0
    %1226 = vmatprep.subr.mxu0 0.0
    %1227 = vmatpush1.msra.mxu0 0.0
    %1228 = vmatprep.subr.mxu0 0.0
    %1229 = vmatpush1.msra.mxu0 0.0
    %1230 = vmatprep.subr.mxu0 0.0
    %1231 = vmatpush1.msra.mxu0 0.0
    %1232 = vmatprep.subr.mxu0 0.0
    %1233 = vmatpush1.msra.mxu0 0.0
    %1234 = vmatprep.subr.mxu0 0.0
    %1235 = vmatpush1.msra.mxu0 0.0
    %1236 = vmatprep.subr.mxu0 0.0
    %1237 = vmatpush1.msra.mxu0 0.0
    %1238 = vmatprep.subr.mxu0 0.0
    %1239 = vmatpush1.msra.mxu0 0.0
    %1240 = vmatprep.subr.mxu0 0.0
    %1241 = vmatpush1.msra.mxu0 0.0
    %1242 = vmatprep.subr.mxu0 0.0
    %1243 = vmatpush1.msra.mxu0 0.0
    %1244 = vmatprep.subr.mxu0 0.0
    %1245 = vmatpush1.msra.mxu0 0.0
    %1246 = vmatprep.subr.mxu0 0.0
    %1247 = vmatpush1.msra.mxu0 0.0
    %1248 = vmatprep.subr.mxu0 0.0
    %1249 = vmatpush1.msra.mxu0 0.0
    %1250 = vmatprep.subr.mxu0 0.0
    %1251 = vmatpush1.msra.mxu0 0.0
    %1252 = vmatprep.subr.mxu0 0.0
    %1253 = vmatpush1.msra.mxu0 0.0
    %1254 = vmatprep.mubr.f32.mxu0 0.0
    %1255 = vmatmul.mubr.f32.gmra.mrb[0].mxu0 %v1179
    %v1256 = vpop.f32.mrb[0].mxu0
    %v1257 = vadd.f32 0.0, %v1256
    %v1258 = vpop.f32.mrb[0].mxu0
    %1259 = vmatprep.mubr.f32.mxu0 0.0
    %1260 = vmatmul.mubr.f32.gmra.mrb[0].mxu0 %v1182
    %v1261 = vpop.f32.mrb[0].mxu0
    %v1262 = vadd.f32 0.0, %v1261
    %v1263 = vpop.f32.mrb[0].mxu0
    %1264 = vmatprep.mubr.f32.mxu0 0.0
    %1265 = vmatmul.mubr.f32.gmra.mrb[0].mxu0 %v1185
    %v1266 = vpop.f32.mrb[0].mxu0
    %v1267 = vadd.f32 0.0, %v1266
    %v1268 = vpop.f32.mrb[0].mxu0
    %1269 = vmatprep.mubr.f32.mxu0 0.0
    %1270 = vmatmul.mubr.f32.gmra.mrb[0].mxu0 %v1188
    %v1271 = vpop.f32.mrb[0].mxu0
    %v1272 = vadd.f32 0.0, %v1271
    %v1273 = vpop.f32.mrb[0].mxu0
    %1274 = vdwg.mxu0
    %v1275 = vadd.f32 %v1165, %v1257
    %v1276 = vadd.f32 %v1166, %v1262
    %v1277 = vadd.f32 %v1167, %v1267
    %v1278 = vadd.f32 %v1168, %v1272
    %v1279 = vld [vmem:[%s6] sm:$0x1]
    %v1281 = vlaneseq
    %v1282 = vshrl.u32 %v1281, 7
    %v1283 = vsub.s32 0, %v1282
    %v1284 = vrot.slane %v1279, %v1283
    %v1286 = vadd.f32 %v1275, %v1284
    %v1287 = vadd.f32 %v1276, %v1284
    %v1288 = vadd.f32 %v1277, %v1284
    %v1289 = vadd.f32 %v1278, %v1284
    %v1290 = vld [vmem:[#allocation3] sm:$0xff]
    %v1291 = vld [vmem:[#allocation3 + $0x8] sm:$0xff]
    %v1292 = vld [vmem:[#allocation3 + $0x10] sm:$0xff]
    %v1293 = vld [vmem:[#allocation3 + $0x18] sm:$0xff]
    %v1294 = vadd.f32 %v1286, %v1290
    %v1295 = vadd.f32 %v1287, %v1291
    %v1296 = vadd.f32 %v1288, %v1292
    %v1297 = vadd.f32 %v1289, %v1293
    %1298 = vst.msk [vmem:[#allocation9] sm:$0xff] %vm78, %v1294
    %1299 = vst.msk [vmem:[#allocation9 + $0x8] sm:$0xff] %vm78, %v1295
    %1300 = vst.msk [vmem:[#allocation9 + $0x10] sm:$0xff] %vm78, %v1296
    %1301 = vst.msk [vmem:[#allocation9 + $0x18] sm:$0xff] %vm78, %v1297
    // Predicated region
    $region42: #{tpu_custom_call.1} parent=1 // pred_check
      _
    $region43: #{tpu_custom_call.1} parent=1 // pred_check_branch
      %1303 = sbr.rel (0) target = $region45
    $region44: #{tpu_custom_call.1} parent=1 // pred_region
      %s1305 = ssub.s32 512, 512
      %1306 = vsyncadd [#allocation5], %s1305
      %s1307 = sshll.u32 [#allocation9], 4
      %s1308 = int_to_ptr.vmem [resolvable:$true] %s1307
      %1313 = dma.vmem_to_hbm [thread:$0]  %s1308, 512, %s7, [#allocation5], 128, 128, 8
    $region45: #{tpu_custom_call.1} parent=1 // pred_fallthru
      _
    // Predicated region
    $region46: #{tpu_custom_call.1} parent=1 // pred_check
      _
    $region47: #{tpu_custom_call.1} parent=1 // pred_check_branch
      %1315 = sbr.rel (0) target = $region49
    $region48: #{tpu_custom_call.1} parent=1 // pred_region
      %1316 = dma.done [#allocation5], 512
    $region49: #{tpu_custom_call.1} parent=1 // pred_fallthru
      _
    %1317 = vsyncpa [#allocation4], 1
    %1318 = vsyncpa [#allocation7], 1
    %1319 = vsyncpa [#allocation5], 1

</llo_original>
